<compile_context>
chip_gen: v6e
topology: v6e:2x2x1
jax: 0.10.0
libtpu: 0.0.40
codegen_flags: <defaults>
</compile_context>

<pallas_src>
import jax
import jax.numpy as jnp
import numpy as np
from jax.experimental import pallas as pl
from jax.experimental.pallas import tpu as pltpu


# ----------------------------- fused Pallas kernel --------------------------

def _make_fused_kernel(Nb, H, W, Cin, C1, C2, C3):
    """Whole forward pass for one batch block of Nb images, entirely in VMEM.

    Activation layout: 2-D, rows = stacked per-image H_l (+2 zero border rows per image in the
    conv scratches), lanes = W_l * C_l (pixel-major / channel-minor).  Stacking the Nb images
    along the row axis makes every matmul see M = Nb * rows.
    """
    R1, L1in, W1out = H,      W * Cin,        W * C1
    R2, L2in, W2out = H // 2, (W // 2) * C1,  (W // 2) * C2
    R3, L3in, W3out = H // 4, (W // 4) * C2,  (W // 4) * C3
    del L2in, L3in  # (documentation only)

    def kernel(x_ref,
               w1_ref, b1_ref, s1_ref,
               w2_ref, b2_ref, s2_ref,
               w3_ref, b3_ref, s3_ref,
               rsel_ref, wf_ref, bl_ref,
               o_ref,
               xp1_ref, xp2_ref, xp3_ref):

        def conv3x3(xp_ref, rows, wc, w_ref, b_ref, relu):
            # ONE wide matmul against the concatenated 3-band weight (kx taps + SAME padding
            # along W folded into each band), then the ky band-sum via shifted row slices.
            t = Nb * (rows + 2)
            acc = jnp.dot(xp_ref[...], w_ref[...], preferred_element_type=jnp.float32)
            y = (acc[0:t - 2, 0:wc]
                 + acc[1:t - 1, wc:2 * wc]
                 + acc[2:t, 2 * wc:3 * wc]) + b_ref[...]
            if relu:
                y = jnp.maximum(y, 0.0)
            # image i owns rows [i*(rows+2), i*(rows+2)+rows); the two rows after each image
            # are junk (border mixing) and are never consumed downstream.
            return y

        def maxpool2x2(y, s_ref):
            # Row-pair max (VPU) + ONE [even|odd] pixel-column selection matmul + max of halves.
            r, l = y.shape
            rmax = jnp.max(y.reshape(r // 2, 2, l), axis=1)
            sel = jnp.dot(rmax, s_ref[...], preferred_element_type=jnp.float32)
            half = l // 2
            return jnp.maximum(sel[:, 0:half], sel[:, half:2 * half])

        def stage(xp_ref, rows_out, p, src_stride):
            # Scatter Nb per-image blocks into the next conv's row-padded scratch.
            # Only the two border rows per image are zeroed; interior rows are fully overwritten.
            zrow = jnp.zeros((1, xp_ref.shape[1]), jnp.float32)
            for i in range(Nb):
                dst = i * (rows_out + 2)
                src = i * src_stride
                xp_ref[dst:dst + 1, :] = zrow
                xp_ref[dst + 1:dst + 1 + rows_out, :] = p[src:src + rows_out, :]
                xp_ref[dst + 1 + rows_out:dst + 2 + rows_out, :] = zrow

        # ---- stage 1: conv1 + nl(ReLU) + (bpool1 = Identity) + pool1 ----
        zrow1 = jnp.zeros((1, L1in), jnp.float32)
        for i in range(Nb):
            dst = i * (R1 + 2)
            xp1_ref[dst:dst + 1, :] = zrow1
            xp1_ref[dst + 1:dst + 1 + R1, :] = x_ref[i]
            xp1_ref[dst + 1 + R1:dst + 2 + R1, :] = zrow1
        p1 = maxpool2x2(conv3x3(xp1_ref, R1, W1out, w1_ref, b1_ref, relu=True), s1_ref)

        # ---- stage 2: conv2 + (bpool2 = Identity) + pool2 ----
        stage(xp2_ref, R2, p1, (R1 + 2) // 2)
        p2 = maxpool2x2(conv3x3(xp2_ref, R2, W2out, w2_ref, b2_ref, relu=False), s2_ref)

        # ---- stage 3: c3 (batches_3 expansion folded) + (bpool3 = Identity) + pool3 ----
        stage(xp3_ref, R3, p2, (R2 + 2) // 2)
        p3 = maxpool2x2(conv3x3(xp3_ref, R3, W3out, w3_ref, b3_ref, relu=False), s3_ref)

        # ---- gpool + last: row sum folded into rsel matmul, avg/concat folded into wf ----
        g = jnp.dot(rsel_ref[...], p3, preferred_element_type=jnp.float32)      # (Nb, Wp*C3)
        out = jnp.dot(g, wf_ref[...], preferred_element_type=jnp.float32) + bl_ref[...]
        o_ref[...] = out.astype(o_ref.dtype)

    return kernel


# ----------------------------- host-side weight prep (hoisted, one-time) -----

def _banded_conv_cat(w9, Wl):
    """(9, Cin, Cout) 3x3 taps (k = ky*3+kx) -> (Wl*Cin, 3*Wl*Cout) concatenated ky bands."""
    _, Cin, Cout = w9.shape
    M = np.stack([np.eye(Wl, k=1), np.eye(Wl), np.eye(Wl, k=-1)]).astype(np.float32)
    w = np.asarray(w9, np.float32).reshape(3, 3, Cin, Cout)          # [ky, kx, c, o]
    B = np.einsum("kab,ykco->yacbo", M, w).reshape(3, Wl * Cin, Wl * Cout)
    return np.concatenate([B[0], B[1], B[2]], axis=-1)


def _pool_select_cat(Wl, C):
    """0/1 matrix selecting [even | odd] pixel blocks along the packed lane axis."""
    x = np.arange(Wl)[:, None]
    j = np.arange(Wl // 2)[None, :]
    eyeC = np.eye(C, dtype=np.float32)
    Se = np.einsum("xj,cd->xcjd", (x == 2 * j).astype(np.float32), eyeC)
    So = np.einsum("xj,cd->xcjd", (x == 2 * j + 1).astype(np.float32), eyeC)
    return np.concatenate([Se.reshape(Wl * C, (Wl // 2) * C),
                           So.reshape(Wl * C, (Wl // 2) * C)], axis=-1)


def _gpool_row_select(Nb, R3):
    """(Nb, P3) 0/1 matrix summing each image's valid pool3 rows (skips inter-image junk rows)."""
    P3 = (Nb * (R3 + 2) - 2) // 2
    rsel = np.zeros((Nb, P3), np.float32)
    step = (R3 + 2) // 2
    for i in range(Nb):
        rsel[i, i * step:i * step + R3 // 2] = 1.0
    return rsel


def prepare_params(params, H, W, Nb, batches_3=3):
    """One-time host-side preprocessing (call once, outside the per-step path)."""
    assert H % 8 == 0 and W % 8 == 0, "three 2x2 pools require H, W divisible by 8"
    Cin, C1 = params["w1"].shape[1], params["w1"].shape[2]
    C2 = params["w2"].shape[2]
    C3 = params["w3"].shape[2]
    K = params["wl"].shape[-1]
    del Cin, K

    Hp, Wp = H // 8, W // 8
    # Fold the batches_3 identical c3 branches + global avg pool scale into the classifier weight.
    wlf = np.asarray(params["wl"], np.float32).reshape(batches_3, C3, -1).sum(axis=0)
    prep = {
        "w1": _banded_conv_cat(params["w1"], W),
        "b1": np.tile(np.asarray(params["b1"], np.float32), (1, W)),
        "s1": _pool_select_cat(W, C1),
        "w2": _banded_conv_cat(params["w2"], W // 2),
        "b2": np.tile(np.asarray(params["b2"], np.float32), (1, W // 2)),
        "s2": _pool_select_cat(W // 2, C2),
        "w3": _banded_conv_cat(params["w3"], W // 4),
        "b3": np.tile(np.asarray(params["b3"], np.float32), (1, W // 4)),
        "s3": _pool_select_cat(W // 4, C3),
        "rsel": _gpool_row_select(Nb, H // 4),
        "wf": np.tile(wlf, (Wp, 1)) / float(Hp * Wp),
        "bl": np.asarray(params["bl"], np.float32),
    }
    return {k: jnp.asarray(v) for k, v in prep.items()}


# ----------------------------- wrapper ---------------------------------------

def model_forward(x_nchw, prep):
    N, Cin, H, W = x_nchw.shape
    Nb = prep["rsel"].shape[0]
    assert N % Nb == 0, "batch must be divisible by the batch block"
    C1 = prep["b1"].shape[1] // W
    C2 = prep["b2"].shape[1] // (W // 2)
    C3 = prep["b3"].shape[1] // (W // 4)
    K = prep["bl"].shape[1]
    del C3

    # NCHW -> NHWC -> lane-packed (N, H, W*Cin)
    x = jnp.transpose(x_nchw, (0, 2, 3, 1)).reshape(N, H, W * Cin)

    kernel = _make_fused_kernel(Nb, H, W, Cin, C1, C2, prep["b3"].shape[1] // (W // 4))
    cmap = lambda n: (0, 0)

    out = pl.pallas_call(
        kernel,
        out_shape=jax.ShapeDtypeStruct((N, K), x_nchw.dtype),
        grid=(N // Nb,),
        in_specs=[
            pl.BlockSpec((Nb, H, W * Cin), lambda n: (n, 0, 0)),
            pl.BlockSpec(prep["w1"].shape, cmap),
            pl.BlockSpec(prep["b1"].shape, cmap),
            pl.BlockSpec(prep["s1"].shape, cmap),
            pl.BlockSpec(prep["w2"].shape, cmap),
            pl.BlockSpec(prep["b2"].shape, cmap),
            pl.BlockSpec(prep["s2"].shape, cmap),
            pl.BlockSpec(prep["w3"].shape, cmap),
            pl.BlockSpec(prep["b3"].shape, cmap),
            pl.BlockSpec(prep["s3"].shape, cmap),
            pl.BlockSpec(prep["rsel"].shape, cmap),
            pl.BlockSpec(prep["wf"].shape, cmap),
            pl.BlockSpec(prep["bl"].shape, cmap),
        ],
        out_specs=pl.BlockSpec((Nb, K), lambda n: (n, 0)),
        scratch_shapes=[
            pltpu.VMEM((Nb * (H + 2), W * Cin), jnp.float32),
            pltpu.VMEM((Nb * (H // 2 + 2), (W // 2) * C1), jnp.float32),
            pltpu.VMEM((Nb * (H // 4 + 2), (W // 4) * C2), jnp.float32),
        ],
        compiler_params=pltpu.CompilerParams(dimension_semantics=("parallel",)),
    )(x, prep["w1"], prep["b1"], prep["s1"],
      prep["w2"], prep["b2"], prep["s2"],
      prep["w3"], prep["b3"], prep["s3"],
      prep["rsel"], prep["wf"], prep["bl"])
    return out.reshape(N, K, 1, 1)                              # NCHW [N, K, 1, 1]


# ----------------------------- pure-JAX reference ----------------------------

def ref_forward(x_nchw, params, batches_3=3):
    x = jnp.transpose(x_nchw, (0, 2, 3, 1))

    def conv(x, w9, b, relu):
        Cin, Cout = w9.shape[1], w9.shape[2]
        w = w9.reshape(3, 3, Cin, Cout)
        y = jax.lax.conv_general_dilated(
            x, w, window_strides=(1, 1), padding="SAME",
            dimension_numbers=("NHWC", "HWIO", "NHWC")) + b[0]
        return jnp.maximum(y, 0.0) if relu else y

    def mp(x):
        return jax.lax.reduce_window(x, -jnp.inf, jax.lax.max,
                                     (1, 2, 2, 1), (1, 2, 2, 1), "VALID")

    x = conv(x, params["w1"], params["b1"], True)
    x = mp(x)
    x = conv(x, params["w2"], params["b2"], False)
    x = mp(x)
    y3 = conv(x, params["w3"], params["b3"], False)
    x = jnp.concatenate([y3] * batches_3, axis=-1)
    x = mp(x)
    x = jnp.mean(x, axis=(1, 2))
    y = x @ params["wl"] + params["bl"][0]
    return y.reshape(y.shape[0], y.shape[1], 1, 1)


# ----------------------------- main ------------------------------------------

if __name__ == "__main__":
    N, Cin, H, W = 2, 4, 16, 16
    C1, C2, C3, B3, K = 8, 16, 8, 3, 10

    key = jax.random.PRNGKey(0)
    ks = jax.random.split(key, 9)
    x = jax.random.normal(ks[0], (N, Cin, H, W), jnp.float32)
    params = {
        "w1": 0.2 * jax.random.normal(ks[1], (9, Cin, C1), jnp.float32),
        "b1": 0.1 * jax.random.normal(ks[2], (1, C1), jnp.float32),
        "w2": 0.2 * jax.random.normal(ks[3], (9, C1, C2), jnp.float32),
        "b2": 0.1 * jax.random.normal(ks[4], (1, C2), jnp.float32),
        "w3": 0.2 * jax.random.normal(ks[5], (9, C2, C3), jnp.float32),
        "b3": 0.1 * jax.random.normal(ks[6], (1, C3), jnp.float32),
        "wl": 0.2 * jax.random.normal(ks[7], (C3 * B3, K), jnp.float32),
        "bl": 0.1 * jax.random.normal(ks[8], (1, K), jnp.float32),
    }

    # Batch blocking: whole batch in one grid step (Nb = N).  On v7x, use Nb = N // 2 so the
    # "parallel" grid axis gives one block to each TensorCore.
    prep = prepare_params(params, H, W, Nb=N, batches_3=B3)
    fwd = jax.jit(model_forward)

    out = jax.block_until_ready(fwd(x, prep))

    ref = ref_forward(x, params, batches_3=B3)
    np.testing.assert_allclose(np.asarray(out), np.asarray(ref), rtol=2e-4, atol=2e-4)

    print("KERNEL_OK")
</pallas_src>

<mosaic_0001>
module attributes {stable_mosaic.version = 11 : i64} {
  func.func @kernel(%arg0: i32, %arg1: memref<2x16x64xf32, #tpu.memory_space<vmem>>, %arg2: memref<64x384xf32, #tpu.memory_space<vmem>>, %arg3: memref<1x128xf32, #tpu.memory_space<vmem>>, %arg4: memref<128x128xf32, #tpu.memory_space<vmem>>, %arg5: memref<64x384xf32, #tpu.memory_space<vmem>>, %arg6: memref<1x128xf32, #tpu.memory_space<vmem>>, %arg7: memref<128x128xf32, #tpu.memory_space<vmem>>, %arg8: memref<64x96xf32, #tpu.memory_space<vmem>>, %arg9: memref<1x32xf32, #tpu.memory_space<vmem>>, %arg10: memref<32x32xf32, #tpu.memory_space<vmem>>, %arg11: memref<2x5xf32, #tpu.memory_space<vmem>>, %arg12: memref<16x10xf32, #tpu.memory_space<vmem>>, %arg13: memref<1x10xf32, #tpu.memory_space<vmem>>, %arg14: memref<2x10xf32, #tpu.memory_space<vmem>>, %arg15: memref<36x64xf32, #tpu.memory_space<vmem>>, %arg16: memref<20x64xf32, #tpu.memory_space<vmem>>, %arg17: memref<12x64xf32, #tpu.memory_space<vmem>>) attributes {dimension_semantics = [#tpu.dimension_semantics<parallel>], iteration_bounds = array<i64: 1>, scalar_prefetch = 0 : i64, scratch_operands = 3 : i64, tpu.core_type = #tpu.core_type<tc>, window_params = [{transform_indices = @transform_0, window_bounds = array<i64: 2, 16, 64>}, {pipeline_mode = #tpu.pipeline_mode<synchronous>, transform_indices = @transform_1, window_bounds = array<i64: 64, 384>}, {pipeline_mode = #tpu.pipeline_mode<synchronous>, transform_indices = @transform_2, window_bounds = array<i64: 1, 128>}, {pipeline_mode = #tpu.pipeline_mode<synchronous>, transform_indices = @transform_3, window_bounds = array<i64: 128, 128>}, {pipeline_mode = #tpu.pipeline_mode<synchronous>, transform_indices = @transform_4, window_bounds = array<i64: 64, 384>}, {pipeline_mode = #tpu.pipeline_mode<synchronous>, transform_indices = @transform_5, window_bounds = array<i64: 1, 128>}, {pipeline_mode = #tpu.pipeline_mode<synchronous>, transform_indices = @transform_6, window_bounds = array<i64: 128, 128>}, {pipeline_mode = #tpu.pipeline_mode<synchronous>, transform_indices = @transform_7, window_bounds = array<i64: 64, 96>}, {pipeline_mode = #tpu.pipeline_mode<synchronous>, transform_indices = @transform_8, window_bounds = array<i64: 1, 32>}, {pipeline_mode = #tpu.pipeline_mode<synchronous>, transform_indices = @transform_9, window_bounds = array<i64: 32, 32>}, {pipeline_mode = #tpu.pipeline_mode<synchronous>, transform_indices = @transform_10, window_bounds = array<i64: 2, 5>}, {pipeline_mode = #tpu.pipeline_mode<synchronous>, transform_indices = @transform_11, window_bounds = array<i64: 16, 10>}, {pipeline_mode = #tpu.pipeline_mode<synchronous>, transform_indices = @transform_12, window_bounds = array<i64: 1, 10>}, {transform_indices = @transform_13, window_bounds = array<i64: 2, 10>}]} {
    %cst = arith.constant 0.000000e+00 : f32
    %0 = vector.broadcast %cst : f32 to vector<1x64xf32>
    %c0 = arith.constant 0 : index
    %c0_0 = arith.constant 0 : index
    %1 = vector.load %arg15[%c0, %c0_0] : memref<36x64xf32, #tpu.memory_space<vmem>>, vector<1x64xf32>
    tpu.vector_store %arg15[%c0, %c0_0], %0 {strides = array<i32>} : memref<36x64xf32, #tpu.memory_space<vmem>>, vector<1x64xf32>,
    %c0_1 = arith.constant 0 : index
    %c0_2 = arith.constant 0 : index
    %c0_3 = arith.constant 0 : index
    %2 = vector.load %arg1[%c0_1, %c0_2, %c0_3] : memref<2x16x64xf32, #tpu.memory_space<vmem>>, vector<1x16x64xf32>
    %3 = vector.shape_cast %2 : vector<1x16x64xf32> to vector<16x64xf32>
    %c1 = arith.constant 1 : index
    %c0_4 = arith.constant 0 : index
    %4 = vector.load %arg15[%c1, %c0_4] : memref<36x64xf32, #tpu.memory_space<vmem>>, vector<16x64xf32>
    tpu.vector_store %arg15[%c1, %c0_4], %3 {strides = array<i32>} : memref<36x64xf32, #tpu.memory_space<vmem>>, vector<16x64xf32>,
    %c17 = arith.constant 17 : index
    %c0_5 = arith.constant 0 : index
    %5 = vector.load %arg15[%c17, %c0_5] : memref<36x64xf32, #tpu.memory_space<vmem>>, vector<1x64xf32>
    tpu.vector_store %arg15[%c17, %c0_5], %0 {strides = array<i32>} : memref<36x64xf32, #tpu.memory_space<vmem>>, vector<1x64xf32>,
    %c18 = arith.constant 18 : index
    %c0_6 = arith.constant 0 : index
    %6 = vector.load %arg15[%c18, %c0_6] : memref<36x64xf32, #tpu.memory_space<vmem>>, vector<1x64xf32>
    tpu.vector_store %arg15[%c18, %c0_6], %0 {strides = array<i32>} : memref<36x64xf32, #tpu.memory_space<vmem>>, vector<1x64xf32>,
    %c1_7 = arith.constant 1 : index
    %c0_8 = arith.constant 0 : index
    %c0_9 = arith.constant 0 : index
    %7 = vector.load %arg1[%c1_7, %c0_8, %c0_9] : memref<2x16x64xf32, #tpu.memory_space<vmem>>, vector<1x16x64xf32>
    %8 = vector.shape_cast %7 : vector<1x16x64xf32> to vector<16x64xf32>
    %c19 = arith.constant 19 : index
    %c0_10 = arith.constant 0 : index
    %9 = vector.load %arg15[%c19, %c0_10] : memref<36x64xf32, #tpu.memory_space<vmem>>, vector<16x64xf32>
    tpu.vector_store %arg15[%c19, %c0_10], %8 {strides = array<i32>} : memref<36x64xf32, #tpu.memory_space<vmem>>, vector<16x64xf32>,
    %c35 = arith.constant 35 : index
    %c0_11 = arith.constant 0 : index
    %10 = vector.load %arg15[%c35, %c0_11] : memref<36x64xf32, #tpu.memory_space<vmem>>, vector<1x64xf32>
    tpu.vector_store %arg15[%c35, %c0_11], %0 {strides = array<i32>} : memref<36x64xf32, #tpu.memory_space<vmem>>, vector<1x64xf32>,
    %c0_12 = arith.constant 0 : index
    %c0_13 = arith.constant 0 : index
    %11 = vector.load %arg15[%c0_12, %c0_13] : memref<36x64xf32, #tpu.memory_space<vmem>>, vector<36x64xf32>
    %c0_14 = arith.constant 0 : index
    %c0_15 = arith.constant 0 : index
    %12 = vector.load %arg2[%c0_14, %c0_15] : memref<64x384xf32, #tpu.memory_space<vmem>>, vector<64x384xf32>
    %cst_16 = arith.constant dense<0.000000e+00> : vector<36x384xf32>
    %13 = tpu.matmul %11, %12, %cst_16 {dimension_numbers = #tpu.dot_dimension_numbers<[1], [0], [0], [1], [0, 0, 1, 1], [], []>} : vector<36x64xf32>, vector<64x384xf32>, vector<36x384xf32> -> vector<36x384xf32>
    %14 = vector.extract_strided_slice %13 {offsets = [0, 0], sizes = [34, 128], strides = [1, 1]} : vector<36x384xf32> to vector<34x128xf32>
    %15 = vector.extract_strided_slice %13 {offsets = [1, 128], sizes = [34, 128], strides = [1, 1]} : vector<36x384xf32> to vector<34x128xf32>
    %16 = arith.addf %14, %15 : vector<34x128xf32>
    %17 = vector.extract_strided_slice %13 {offsets = [2, 256], sizes = [34, 128], strides = [1, 1]} : vector<36x384xf32> to vector<34x128xf32>
    %18 = arith.addf %16, %17 : vector<34x128xf32>
    %c0_17 = arith.constant 0 : index
    %c0_18 = arith.constant 0 : index
    %19 = vector.load %arg3[%c0_17, %c0_18] : memref<1x128xf32, #tpu.memory_space<vmem>>, vector<1x128xf32>
    %20 = vector.broadcast %19 : vector<1x128xf32> to vector<34x128xf32>
    %21 = arith.addf %18, %20 : vector<34x128xf32>
    %cst_19 = arith.constant 0.000000e+00 : f32
    %22 = vector.broadcast %cst_19 : f32 to vector<34x128xf32>
    %23 = arith.maximumf %21, %22 : vector<34x128xf32>
    %24 = vector.shape_cast %23 : vector<34x128xf32> to vector<17x2x128xf32>
    %cst_20 = arith.constant dense<0xFF800000> : vector<17x128xf32>
    %25 = vector.multi_reduction <maximumf>, %24, %cst_20 [1] : vector<17x2x128xf32> to vector<17x128xf32>
    %c0_21 = arith.constant 0 : index
    %c0_22 = arith.constant 0 : index
    %26 = vector.load %arg4[%c0_21, %c0_22] : memref<128x128xf32, #tpu.memory_space<vmem>>, vector<128x128xf32>
    %cst_23 = arith.constant dense<0.000000e+00> : vector<17x128xf32>
    %27 = tpu.matmul %25, %26, %cst_23 {dimension_numbers = #tpu.dot_dimension_numbers<[1], [0], [0], [1], [0, 0, 1, 1], [], []>} : vector<17x128xf32>, vector<128x128xf32>, vector<17x128xf32> -> vector<17x128xf32>
    %28 = vector.extract_strided_slice %27 {offsets = [0, 0], sizes = [17, 64], strides = [1, 1]} : vector<17x128xf32> to vector<17x64xf32>
    %29 = vector.extract_strided_slice %27 {offsets = [0, 64], sizes = [17, 64], strides = [1, 1]} : vector<17x128xf32> to vector<17x64xf32>
    %30 = arith.maximumf %28, %29 : vector<17x64xf32>
    %cst_24 = arith.constant 0.000000e+00 : f32
    %31 = vector.broadcast %cst_24 : f32 to vector<1x64xf32>
    %c0_25 = arith.constant 0 : index
    %c0_26 = arith.constant 0 : index
    %32 = vector.load %arg16[%c0_25, %c0_26] : memref<20x64xf32, #tpu.memory_space<vmem>>, vector<1x64xf32>
    tpu.vector_store %arg16[%c0_25, %c0_26], %31 {strides = array<i32>} : memref<20x64xf32, #tpu.memory_space<vmem>>, vector<1x64xf32>,
    %33 = vector.extract_strided_slice %30 {offsets = [0, 0], sizes = [8, 64], strides = [1, 1]} : vector<17x64xf32> to vector<8x64xf32>
    %c1_27 = arith.constant 1 : index
    %c0_28 = arith.constant 0 : index
    %34 = vector.load %arg16[%c1_27, %c0_28] : memref<20x64xf32, #tpu.memory_space<vmem>>, vector<8x64xf32>
    tpu.vector_store %arg16[%c1_27, %c0_28], %33 {strides = array<i32>} : memref<20x64xf32, #tpu.memory_space<vmem>>, vector<8x64xf32>,
    %c9 = arith.constant 9 : index
    %c0_29 = arith.constant 0 : index
    %35 = vector.load %arg16[%c9, %c0_29] : memref<20x64xf32, #tpu.memory_space<vmem>>, vector<1x64xf32>
    tpu.vector_store %arg16[%c9, %c0_29], %31 {strides = array<i32>} : memref<20x64xf32, #tpu.memory_space<vmem>>, vector<1x64xf32>,
    %c10 = arith.constant 10 : index
    %c0_30 = arith.constant 0 : index
    %36 = vector.load %arg16[%c10, %c0_30] : memref<20x64xf32, #tpu.memory_space<vmem>>, vector<1x64xf32>
    tpu.vector_store %arg16[%c10, %c0_30], %31 {strides = array<i32>} : memref<20x64xf32, #tpu.memory_space<vmem>>, vector<1x64xf32>,
    %37 = vector.extract_strided_slice %30 {offsets = [9, 0], sizes = [8, 64], strides = [1, 1]} : vector<17x64xf32> to vector<8x64xf32>
    %c11 = arith.constant 11 : index
    %c0_31 = arith.constant 0 : index
    %38 = vector.load %arg16[%c11, %c0_31] : memref<20x64xf32, #tpu.memory_space<vmem>>, vector<8x64xf32>
    tpu.vector_store %arg16[%c11, %c0_31], %37 {strides = array<i32>} : memref<20x64xf32, #tpu.memory_space<vmem>>, vector<8x64xf32>,
    %c19_32 = arith.constant 19 : index
    %c0_33 = arith.constant 0 : index
    %39 = vector.load %arg16[%c19_32, %c0_33] : memref<20x64xf32, #tpu.memory_space<vmem>>, vector<1x64xf32>
    tpu.vector_store %arg16[%c19_32, %c0_33], %31 {strides = array<i32>} : memref<20x64xf32, #tpu.memory_space<vmem>>, vector<1x64xf32>,
    %c0_34 = arith.constant 0 : index
    %c0_35 = arith.constant 0 : index
    %40 = vector.load %arg16[%c0_34, %c0_35] : memref<20x64xf32, #tpu.memory_space<vmem>>, vector<20x64xf32>
    %c0_36 = arith.constant 0 : index
    %c0_37 = arith.constant 0 : index
    %41 = vector.load %arg5[%c0_36, %c0_37] : memref<64x384xf32, #tpu.memory_space<vmem>>, vector<64x384xf32>
    %cst_38 = arith.constant dense<0.000000e+00> : vector<20x384xf32>
    %42 = tpu.matmul %40, %41, %cst_38 {dimension_numbers = #tpu.dot_dimension_numbers<[1], [0], [0], [1], [0, 0, 1, 1], [], []>} : vector<20x64xf32>, vector<64x384xf32>, vector<20x384xf32> -> vector<20x384xf32>
    %43 = vector.extract_strided_slice %42 {offsets = [0, 0], sizes = [18, 128], strides = [1, 1]} : vector<20x384xf32> to vector<18x128xf32>
    %44 = vector.extract_strided_slice %42 {offsets = [1, 128], sizes = [18, 128], strides = [1, 1]} : vector<20x384xf32> to vector<18x128xf32>
    %45 = arith.addf %43, %44 : vector<18x128xf32>
    %46 = vector.extract_strided_slice %42 {offsets = [2, 256], sizes = [18, 128], strides = [1, 1]} : vector<20x384xf32> to vector<18x128xf32>
    %47 = arith.addf %45, %46 : vector<18x128xf32>
    %c0_39 = arith.constant 0 : index
    %c0_40 = arith.constant 0 : index
    %48 = vector.load %arg6[%c0_39, %c0_40] : memref<1x128xf32, #tpu.memory_space<vmem>>, vector<1x128xf32>
    %49 = vector.broadcast %48 : vector<1x128xf32> to vector<18x128xf32>
    %50 = arith.addf %47, %49 : vector<18x128xf32>
    %51 = vector.shape_cast %50 : vector<18x128xf32> to vector<9x2x128xf32>
    %cst_41 = arith.constant dense<0xFF800000> : vector<9x128xf32>
    %52 = vector.multi_reduction <maximumf>, %51, %cst_41 [1] : vector<9x2x128xf32> to vector<9x128xf32>
    %c0_42 = arith.constant 0 : index
    %c0_43 = arith.constant 0 : index
    %53 = vector.load %arg7[%c0_42, %c0_43] : memref<128x128xf32, #tpu.memory_space<vmem>>, vector<128x128xf32>
    %cst_44 = arith.constant dense<0.000000e+00> : vector<9x128xf32>
    %54 = tpu.matmul %52, %53, %cst_44 {dimension_numbers = #tpu.dot_dimension_numbers<[1], [0], [0], [1], [0, 0, 1, 1], [], []>} : vector<9x128xf32>, vector<128x128xf32>, vector<9x128xf32> -> vector<9x128xf32>
    %55 = vector.extract_strided_slice %54 {offsets = [0, 0], sizes = [9, 64], strides = [1, 1]} : vector<9x128xf32> to vector<9x64xf32>
    %56 = vector.extract_strided_slice %54 {offsets = [0, 64], sizes = [9, 64], strides = [1, 1]} : vector<9x128xf32> to vector<9x64xf32>
    %57 = arith.maximumf %55, %56 : vector<9x64xf32>
    %cst_45 = arith.constant 0.000000e+00 : f32
    %58 = vector.broadcast %cst_45 : f32 to vector<1x64xf32>
    %c0_46 = arith.constant 0 : index
    %c0_47 = arith.constant 0 : index
    %59 = vector.load %arg17[%c0_46, %c0_47] : memref<12x64xf32, #tpu.memory_space<vmem>>, vector<1x64xf32>
    tpu.vector_store %arg17[%c0_46, %c0_47], %58 {strides = array<i32>} : memref<12x64xf32, #tpu.memory_space<vmem>>, vector<1x64xf32>,
    %60 = vector.extract_strided_slice %57 {offsets = [0, 0], sizes = [4, 64], strides = [1, 1]} : vector<9x64xf32> to vector<4x64xf32>
    %c1_48 = arith.constant 1 : index
    %c0_49 = arith.constant 0 : index
    %61 = vector.load %arg17[%c1_48, %c0_49] : memref<12x64xf32, #tpu.memory_space<vmem>>, vector<4x64xf32>
    tpu.vector_store %arg17[%c1_48, %c0_49], %60 {strides = array<i32>} : memref<12x64xf32, #tpu.memory_space<vmem>>, vector<4x64xf32>,
    %c5 = arith.constant 5 : index
    %c0_50 = arith.constant 0 : index
    %62 = vector.load %arg17[%c5, %c0_50] : memref<12x64xf32, #tpu.memory_space<vmem>>, vector<1x64xf32>
    tpu.vector_store %arg17[%c5, %c0_50], %58 {strides = array<i32>} : memref<12x64xf32, #tpu.memory_space<vmem>>, vector<1x64xf32>,
    %c6 = arith.constant 6 : index
    %c0_51 = arith.constant 0 : index
    %63 = vector.load %arg17[%c6, %c0_51] : memref<12x64xf32, #tpu.memory_space<vmem>>, vector<1x64xf32>
    tpu.vector_store %arg17[%c6, %c0_51], %58 {strides = array<i32>} : memref<12x64xf32, #tpu.memory_space<vmem>>, vector<1x64xf32>,
    %64 = vector.extract_strided_slice %57 {offsets = [5, 0], sizes = [4, 64], strides = [1, 1]} : vector<9x64xf32> to vector<4x64xf32>
    %c7 = arith.constant 7 : index
    %c0_52 = arith.constant 0 : index
    %65 = vector.load %arg17[%c7, %c0_52] : memref<12x64xf32, #tpu.memory_space<vmem>>, vector<4x64xf32>
    tpu.vector_store %arg17[%c7, %c0_52], %64 {strides = array<i32>} : memref<12x64xf32, #tpu.memory_space<vmem>>, vector<4x64xf32>,
    %c11_53 = arith.constant 11 : index
    %c0_54 = arith.constant 0 : index
    %66 = vector.load %arg17[%c11_53, %c0_54] : memref<12x64xf32, #tpu.memory_space<vmem>>, vector<1x64xf32>
    tpu.vector_store %arg17[%c11_53, %c0_54], %58 {strides = array<i32>} : memref<12x64xf32, #tpu.memory_space<vmem>>, vector<1x64xf32>,
    %c0_55 = arith.constant 0 : index
    %c0_56 = arith.constant 0 : index
    %67 = vector.load %arg17[%c0_55, %c0_56] : memref<12x64xf32, #tpu.memory_space<vmem>>, vector<12x64xf32>
    %c0_57 = arith.constant 0 : index
    %c0_58 = arith.constant 0 : index
    %68 = vector.load %arg8[%c0_57, %c0_58] : memref<64x96xf32, #tpu.memory_space<vmem>>, vector<64x96xf32>
    %cst_59 = arith.constant dense<0.000000e+00> : vector<12x96xf32>
    %69 = tpu.matmul %67, %68, %cst_59 {dimension_numbers = #tpu.dot_dimension_numbers<[1], [0], [0], [1], [0, 0, 1, 1], [], []>} : vector<12x64xf32>, vector<64x96xf32>, vector<12x96xf32> -> vector<12x96xf32>
    %70 = vector.extract_strided_slice %69 {offsets = [0, 0], sizes = [10, 32], strides = [1, 1]} : vector<12x96xf32> to vector<10x32xf32>
    %71 = vector.extract_strided_slice %69 {offsets = [1, 32], sizes = [10, 32], strides = [1, 1]} : vector<12x96xf32> to vector<10x32xf32>
    %72 = arith.addf %70, %71 : vector<10x32xf32>
    %73 = vector.extract_strided_slice %69 {offsets = [2, 64], sizes = [10, 32], strides = [1, 1]} : vector<12x96xf32> to vector<10x32xf32>
    %74 = arith.addf %72, %73 : vector<10x32xf32>
    %c0_60 = arith.constant 0 : index
    %c0_61 = arith.constant 0 : index
    %75 = vector.load %arg9[%c0_60, %c0_61] : memref<1x32xf32, #tpu.memory_space<vmem>>, vector<1x32xf32>
    %76 = vector.broadcast %75 : vector<1x32xf32> to vector<10x32xf32>
    %77 = arith.addf %74, %76 : vector<10x32xf32>
    %78 = vector.shape_cast %77 : vector<10x32xf32> to vector<5x2x32xf32>
    %cst_62 = arith.constant dense<0xFF800000> : vector<5x32xf32>
    %79 = vector.multi_reduction <maximumf>, %78, %cst_62 [1] : vector<5x2x32xf32> to vector<5x32xf32>
    %c0_63 = arith.constant 0 : index
    %c0_64 = arith.constant 0 : index
    %80 = vector.load %arg10[%c0_63, %c0_64] : memref<32x32xf32, #tpu.memory_space<vmem>>, vector<32x32xf32>
    %cst_65 = arith.constant dense<0.000000e+00> : vector<5x32xf32>
    %81 = tpu.matmul %79, %80, %cst_65 {dimension_numbers = #tpu.dot_dimension_numbers<[1], [0], [0], [1], [0, 0, 1, 1], [], []>} : vector<5x32xf32>, vector<32x32xf32>, vector<5x32xf32> -> vector<5x32xf32>
    %82 = vector.extract_strided_slice %81 {offsets = [0, 0], sizes = [5, 16], strides = [1, 1]} : vector<5x32xf32> to vector<5x16xf32>
    %83 = vector.extract_strided_slice %81 {offsets = [0, 16], sizes = [5, 16], strides = [1, 1]} : vector<5x32xf32> to vector<5x16xf32>
    %84 = arith.maximumf %82, %83 : vector<5x16xf32>
    %c0_66 = arith.constant 0 : index
    %c0_67 = arith.constant 0 : index
    %85 = vector.load %arg11[%c0_66, %c0_67] : memref<2x5xf32, #tpu.memory_space<vmem>>, vector<2x5xf32>
    %cst_68 = arith.constant dense<0.000000e+00> : vector<2x16xf32>
    %86 = tpu.matmul %85, %84, %cst_68 {dimension_numbers = #tpu.dot_dimension_numbers<[1], [0], [0], [1], [0, 0, 1, 1], [], []>} : vector<2x5xf32>, vector<5x16xf32>, vector<2x16xf32> -> vector<2x16xf32>
    %c0_69 = arith.constant 0 : index
    %c0_70 = arith.constant 0 : index
    %87 = vector.load %arg12[%c0_69, %c0_70] : memref<16x10xf32, #tpu.memory_space<vmem>>, vector<16x10xf32>
    %cst_71 = arith.constant dense<0.000000e+00> : vector<2x10xf32>
    %88 = tpu.matmul %86, %87, %cst_71 {dimension_numbers = #tpu.dot_dimension_numbers<[1], [0], [0], [1], [0, 0, 1, 1], [], []>} : vector<2x16xf32>, vector<16x10xf32>, vector<2x10xf32> -> vector<2x10xf32>
    %c0_72 = arith.constant 0 : index
    %c0_73 = arith.constant 0 : index
    %89 = vector.load %arg13[%c0_72, %c0_73] : memref<1x10xf32, #tpu.memory_space<vmem>>, vector<1x10xf32>
    %90 = vector.broadcast %89 : vector<1x10xf32> to vector<2x10xf32>
    %91 = arith.addf %88, %90 : vector<2x10xf32>
    %c0_74 = arith.constant 0 : index
    %c0_75 = arith.constant 0 : index
    %92 = vector.load %arg14[%c0_74, %c0_75] : memref<2x10xf32, #tpu.memory_space<vmem>>, vector<2x10xf32>
    tpu.vector_store %arg14[%c0_74, %c0_75], %91 {strides = array<i32>} : memref<2x10xf32, #tpu.memory_space<vmem>>, vector<2x10xf32>,
    return
  }
  func.func @transform_0(%arg0: i32) -> (i32, i32, i32) {
    %c0_i32 = arith.constant 0 : i32
    %c0_i32_0 = arith.constant 0 : i32
    %c0_i32_1 = arith.constant 0 : i32
    return %arg0, %c0_i32, %c0_i32_0 : i32, i32, i32
  }
  func.func @transform_1(%arg0: i32) -> (i32, i32) {
    %c0_i32 = arith.constant 0 : i32
    %c0_i32_0 = arith.constant 0 : i32
    %c0_i32_1 = arith.constant 0 : i32
    return %c0_i32, %c0_i32_0 : i32, i32
  }
  func.func @transform_2(%arg0: i32) -> (i32, i32) {
    %c0_i32 = arith.constant 0 : i32
    %c0_i32_0 = arith.constant 0 : i32
    %c0_i32_1 = arith.constant 0 : i32
    return %c0_i32, %c0_i32_0 : i32, i32
  }
  func.func @transform_3(%arg0: i32) -> (i32, i32) {
    %c0_i32 = arith.constant 0 : i32
    %c0_i32_0 = arith.constant 0 : i32
    %c0_i32_1 = arith.constant 0 : i32
    return %c0_i32, %c0_i32_0 : i32, i32
  }
  func.func @transform_4(%arg0: i32) -> (i32, i32) {
    %c0_i32 = arith.constant 0 : i32
    %c0_i32_0 = arith.constant 0 : i32
    %c0_i32_1 = arith.constant 0 : i32
    return %c0_i32, %c0_i32_0 : i32, i32
  }
  func.func @transform_5(%arg0: i32) -> (i32, i32) {
    %c0_i32 = arith.constant 0 : i32
    %c0_i32_0 = arith.constant 0 : i32
    %c0_i32_1 = arith.constant 0 : i32
    return %c0_i32, %c0_i32_0 : i32, i32
  }
  func.func @transform_6(%arg0: i32) -> (i32, i32) {
    %c0_i32 = arith.constant 0 : i32
    %c0_i32_0 = arith.constant 0 : i32
    %c0_i32_1 = arith.constant 0 : i32
    return %c0_i32, %c0_i32_0 : i32, i32
  }
  func.func @transform_7(%arg0: i32) -> (i32, i32) {
    %c0_i32 = arith.constant 0 : i32
    %c0_i32_0 = arith.constant 0 : i32
    %c0_i32_1 = arith.constant 0 : i32
    return %c0_i32, %c0_i32_0 : i32, i32
  }
  func.func @transform_8(%arg0: i32) -> (i32, i32) {
    %c0_i32 = arith.constant 0 : i32
    %c0_i32_0 = arith.constant 0 : i32
    %c0_i32_1 = arith.constant 0 : i32
    return %c0_i32, %c0_i32_0 : i32, i32
  }
  func.func @transform_9(%arg0: i32) -> (i32, i32) {
    %c0_i32 = arith.constant 0 : i32
    %c0_i32_0 = arith.constant 0 : i32
    %c0_i32_1 = arith.constant 0 : i32
    return %c0_i32, %c0_i32_0 : i32, i32
  }
  func.func @transform_10(%arg0: i32) -> (i32, i32) {
    %c0_i32 = arith.constant 0 : i32
    %c0_i32_0 = arith.constant 0 : i32
    %c0_i32_1 = arith.constant 0 : i32
    return %c0_i32, %c0_i32_0 : i32, i32
  }
  func.func @transform_11(%arg0: i32) -> (i32, i32) {
    %c0_i32 = arith.constant 0 : i32
    %c0_i32_0 = arith.constant 0 : i32
    %c0_i32_1 = arith.constant 0 : i32
    return %c0_i32, %c0_i32_0 : i32, i32
  }
  func.func @transform_12(%arg0: i32) -> (i32, i32) {
    %c0_i32 = arith.constant 0 : i32
    %c0_i32_0 = arith.constant 0 : i32
    %c0_i32_1 = arith.constant 0 : i32
    return %c0_i32, %c0_i32_0 : i32, i32
  }
  func.func @transform_13(%arg0: i32) -> (i32, i32) {
    %c0_i32 = arith.constant 0 : i32
    %c0_i32_0 = arith.constant 0 : i32
    return %arg0, %c0_i32 : i32, i32
  }
}

</mosaic_0001>

<llo_original>
// kernel: model_forward.1
$region0: #{model_forward.1}
  #allocation0 [shape = 'u32[]', space=smem, size = 0x4, offset = 0x4, fixed_abs, tag = 'smem constant byte address 0x4 - core index']
  #allocation1 [shape = 'u32[144,128]{1,0:T(1,128)}', space=vmem, size = 0x12000, scoped, tag = 'internal scratch']
  #allocation2 [shape = 'f32[36,64]{1,0:T(8,128)}', space=vmem, size = 0x5000, scoped, tag = 'scratch operand']
  #allocation3 [shape = 'f32[20,64]{1,0:T(8,128)}', space=vmem, size = 0x3000, scoped, tag = 'scratch operand']
  #allocation4 [shape = 'f32[12,64]{1,0:T(8,128)}', space=vmem, size = 0x2000, scoped, tag = 'scratch operand']
  %s0 = inlined_call_operand.vmem [shape: f32[2,16,64], index: 0, kind: input, shape index: {}]
  %s1 = inlined_call_operand.vmem [shape: f32[64,384], index: 1, kind: input, shape index: {}]
  %s2 = inlined_call_operand.hbm [shape: f32[1,128], index: 2, kind: input, shape index: {}]
  %s3 = inlined_call_operand.hbm [shape: f32[128,128], index: 3, kind: input, shape index: {}]
  %s4 = inlined_call_operand.vmem [shape: f32[64,384], index: 4, kind: input, shape index: {}]
  %s5 = inlined_call_operand.hbm [shape: f32[1,128], index: 5, kind: input, shape index: {}]
  %s6 = inlined_call_operand.hbm [shape: f32[128,128], index: 6, kind: input, shape index: {}]
  %s7 = inlined_call_operand.hbm [shape: f32[64,96], index: 7, kind: input, shape index: {}]
  %s8 = inlined_call_operand.hbm [shape: f32[1,32], index: 8, kind: input, shape index: {}]
  %s9 = inlined_call_operand.vmem [shape: f32[32,32], index: 9, kind: input, shape index: {}]
  %s10 = inlined_call_operand.vmem [shape: f32[2,5], index: 10, kind: input, shape index: {}]
  %s11 = inlined_call_operand.vmem [shape: f32[16,10], index: 11, kind: input, shape index: {}]
  %s12 = inlined_call_operand.hbm [shape: f32[1,10], index: 12, kind: input, shape index: {}]
  %s13 = inlined_call_operand.hbm [shape: f32[2,10], index: 13, kind: output, shape index: {}]
  %s14 = sld [smem:[#allocation0]]
  $region90: #{model_forward.1} parent=0
    _
  %s16 = ssub.s32 1, %s14
  %s17 = scalar_select 0, %s16, %s14
  $region1: #{model_forward.1} parent=0
    #allocation5 [shape = 'u8[512]{0}', space=vmem, size = 0x400, scoped, tag = 'input window, operand 2, single buffered']
    #allocation6 [shape = 's32[1]{0}', space=sflag, size = 0x4, scoped, tag = 'scoped memory for model_forward.1']
    #allocation7 [shape = 's32[1]{0}', space=sflag, size = 0x4, scoped, tag = 'scoped memory for model_forward.1']
    #allocation8 [shape = 'u8[65536]{0}', space=vmem, size = 0x10000, scoped, tag = 'input window, operand 3, single buffered']
    #allocation9 [shape = 's32[1]{0}', space=sflag, size = 0x4, scoped, tag = 'scoped memory for model_forward.1']
    #allocation10 [shape = 'u8[512]{0}', space=vmem, size = 0x400, scoped, tag = 'input window, operand 5, single buffered']
    #allocation11 [shape = 'u8[65536]{0}', space=vmem, size = 0x10000, scoped, tag = 'input window, operand 6, single buffered']
    #allocation12 [shape = 's32[1]{0}', space=sflag, size = 0x4, scoped, tag = 'scoped memory for model_forward.1']
    #allocation13 [shape = 'u8[32768]{0}', space=vmem, size = 0x8000, scoped, tag = 'input window, operand 7, single buffered']
    #allocation14 [shape = 'u8[512]{0}', space=vmem, size = 0x400, scoped, tag = 'input window, operand 8, single buffered']
    #allocation15 [shape = 's32[1]{0}', space=sflag, size = 0x4, scoped, tag = 'scoped memory for model_forward.1']
    #allocation16 [shape = 'u8[512]{0}', space=vmem, size = 0x400, scoped, tag = 'input window, operand 12, single buffered']
    #allocation17 [shape = 'u8[1024]{0}', space=vmem, size = 0x400, scoped, tag = 'output window, operand 0, single buffered']
    %18 = vsyncpa [#allocation6], 0
    %19 = vsyncpa [#allocation9], 0
    %20 = vsyncpa [#allocation12], 0
    %21 = vsyncpa [#allocation15], 0
    %22 = vsyncpa [#allocation7], 0
    // Predicated region
    $region2: #{model_forward.1} parent=1 // pred_check
      _
    $region3: #{model_forward.1} parent=1 // pred_check_branch
      %24 = sbr.rel (0) target = $region5
    $region4: #{model_forward.1} parent=1 // pred_region
      _
    $region5: #{model_forward.1} parent=1 // pred_fallthru
      _
    // Predicated region
    $region6: #{model_forward.1} parent=1 // pred_check
      _
    $region7: #{model_forward.1} parent=1 // pred_check_branch
      %26 = sbr.rel (0) target = $region9
    $region8: #{model_forward.1} parent=1 // pred_region
      _
    $region9: #{model_forward.1} parent=1 // pred_fallthru
      _
    // Predicated region
    $region10: #{model_forward.1} parent=1 // pred_check
      _
    $region11: #{model_forward.1} parent=1 // pred_check_branch
      %28 = sbr.rel (0) target = $region13
    $region12: #{model_forward.1} parent=1 // pred_region
      %s30 = ssub.s32 16, 16
      %31 = vsyncadd [#allocation6], %s30
      %s33 = sshll.u32 [#allocation5], 4
      %s34 = int_to_ptr.vmem [resolvable:$true] %s33
      %36 = dma.hbm_to_vmem [thread:$0]  %s2, 16, %s34, [#allocation6]
    $region13: #{model_forward.1} parent=1 // pred_fallthru
      _
    // Predicated region
    $region14: #{model_forward.1} parent=1 // pred_check
      _
    $region15: #{model_forward.1} parent=1 // pred_check_branch
      %38 = sbr.rel (0) target = $region17
    $region16: #{model_forward.1} parent=1 // pred_region
      %s40 = ssub.s32 2048, 2048
      %41 = vsyncadd [#allocation9], %s40
      %s42 = sshll.u32 [#allocation8], 4
      %s43 = int_to_ptr.vmem [resolvable:$true] %s42
      %48 = dma.hbm_to_vmem [thread:$0]  %s3, 2048, %s43, [#allocation9], 128, 128, 8
    $region17: #{model_forward.1} parent=1 // pred_fallthru
      _
    // Predicated region
    $region18: #{model_forward.1} parent=1 // pred_check
      _
    $region19: #{model_forward.1} parent=1 // pred_check_branch
      %50 = sbr.rel (0) target = $region21
    $region20: #{model_forward.1} parent=1 // pred_region
      _
    $region21: #{model_forward.1} parent=1 // pred_fallthru
      _
    // Predicated region
    $region22: #{model_forward.1} parent=1 // pred_check
      _
    $region23: #{model_forward.1} parent=1 // pred_check_branch
      %52 = sbr.rel (0) target = $region25
    $region24: #{model_forward.1} parent=1 // pred_region
      %s54 = ssub.s32 16, 16
      %55 = vsyncadd [#allocation9], %s54
      %s57 = sshll.u32 [#allocation10], 4
      %s58 = int_to_ptr.vmem [resolvable:$true] %s57
      %60 = dma.hbm_to_vmem [thread:$0]  %s5, 16, %s58, [#allocation9]
    $region25: #{model_forward.1} parent=1 // pred_fallthru
      _
    // Predicated region
    $region26: #{model_forward.1} parent=1 // pred_check
      _
    $region27: #{model_forward.1} parent=1 // pred_check_branch
      %62 = sbr.rel (0) target = $region29
    $region28: #{model_forward.1} parent=1 // pred_region
      %s64 = ssub.s32 2048, 2048
      %65 = vsyncadd [#allocation12], %s64
      %s66 = sshll.u32 [#allocation11], 4
      %s67 = int_to_ptr.vmem [resolvable:$true] %s66
      %72 = dma.hbm_to_vmem [thread:$0]  %s6, 2048, %s67, [#allocation12], 128, 128, 8
    $region29: #{model_forward.1} parent=1 // pred_fallthru
      _
    // Predicated region
    $region30: #{model_forward.1} parent=1 // pred_check
      _
    $region31: #{model_forward.1} parent=1 // pred_check_branch
      %74 = sbr.rel (0) target = $region33
    $region32: #{model_forward.1} parent=1 // pred_region
      %s76 = ssub.s32 1024, 1024
      %77 = vsyncadd [#allocation12], %s76
      %s78 = sshll.u32 [#allocation13], 4
      %s79 = int_to_ptr.vmem [resolvable:$true] %s78
      %84 = dma.hbm_to_vmem [thread:$0]  %s7, 1024, %s79, [#allocation12], 128, 128, 8
    $region33: #{model_forward.1} parent=1 // pred_fallthru
      _
    // Predicated region
    $region34: #{model_forward.1} parent=1 // pred_check
      _
    $region35: #{model_forward.1} parent=1 // pred_check_branch
      %86 = sbr.rel (0) target = $region37
    $region36: #{model_forward.1} parent=1 // pred_region
      %s88 = ssub.s32 16, 16
      %89 = vsyncadd [#allocation15], %s88
      %s91 = sshll.u32 [#allocation14], 4
      %s92 = int_to_ptr.vmem [resolvable:$true] %s91
      %94 = dma.hbm_to_vmem [thread:$0]  %s8, 16, %s92, [#allocation15]
    $region37: #{model_forward.1} parent=1 // pred_fallthru
      _
    // Predicated region
    $region38: #{model_forward.1} parent=1 // pred_check
      _
    $region39: #{model_forward.1} parent=1 // pred_check_branch
      %96 = sbr.rel (0) target = $region41
    $region40: #{model_forward.1} parent=1 // pred_region
      _
    $region41: #{model_forward.1} parent=1 // pred_fallthru
      _
    // Predicated region
    $region42: #{model_forward.1} parent=1 // pred_check
      _
    $region43: #{model_forward.1} parent=1 // pred_check_branch
      %98 = sbr.rel (0) target = $region45
    $region44: #{model_forward.1} parent=1 // pred_region
      _
    $region45: #{model_forward.1} parent=1 // pred_fallthru
      _
    // Predicated region
    $region46: #{model_forward.1} parent=1 // pred_check
      _
    $region47: #{model_forward.1} parent=1 // pred_check_branch
      %100 = sbr.rel (0) target = $region49
    $region48: #{model_forward.1} parent=1 // pred_region
      _
    $region49: #{model_forward.1} parent=1 // pred_fallthru
      _
    // Predicated region
    $region50: #{model_forward.1} parent=1 // pred_check
      _
    $region51: #{model_forward.1} parent=1 // pred_check_branch
      %102 = sbr.rel (0) target = $region53
    $region52: #{model_forward.1} parent=1 // pred_region
      %s104 = ssub.s32 16, 16
      %105 = vsyncadd [#allocation15], %s104
      %s107 = sshll.u32 [#allocation16], 4
      %s108 = int_to_ptr.vmem [resolvable:$true] %s107
      %110 = dma.hbm_to_vmem [thread:$0]  %s12, 16, %s108, [#allocation15]
    $region53: #{model_forward.1} parent=1 // pred_fallthru
      _
    // Predicated region
    $region54: #{model_forward.1} parent=1 // pred_check
      _
    $region55: #{model_forward.1} parent=1 // pred_check_branch
      %112 = sbr.rel (0) target = $region57
    $region56: #{model_forward.1} parent=1 // pred_region
      %113 = dma.done [#allocation6], 16
    $region57: #{model_forward.1} parent=1 // pred_fallthru
      _
    // Predicated region
    $region58: #{model_forward.1} parent=1 // pred_check
      _
    $region59: #{model_forward.1} parent=1 // pred_check_branch
      %115 = sbr.rel (0) target = $region61
    $region60: #{model_forward.1} parent=1 // pred_region
      %116 = dma.done [#allocation9], 2048
    $region61: #{model_forward.1} parent=1 // pred_fallthru
      _
    // Predicated region
    $region62: #{model_forward.1} parent=1 // pred_check
      _
    $region63: #{model_forward.1} parent=1 // pred_check_branch
      %118 = sbr.rel (0) target = $region65
    $region64: #{model_forward.1} parent=1 // pred_region
      %119 = dma.done [#allocation9], 16
    $region65: #{model_forward.1} parent=1 // pred_fallthru
      _
    // Predicated region
    $region66: #{model_forward.1} parent=1 // pred_check
      _
    $region67: #{model_forward.1} parent=1 // pred_check_branch
      %121 = sbr.rel (0) target = $region69
    $region68: #{model_forward.1} parent=1 // pred_region
      %122 = dma.done [#allocation12], 2048
    $region69: #{model_forward.1} parent=1 // pred_fallthru
      _
    // Predicated region
    $region70: #{model_forward.1} parent=1 // pred_check
      _
    $region71: #{model_forward.1} parent=1 // pred_check_branch
      %124 = sbr.rel (0) target = $region73
    $region72: #{model_forward.1} parent=1 // pred_region
      %125 = dma.done [#allocation12], 1024
    $region73: #{model_forward.1} parent=1 // pred_fallthru
      _
    // Predicated region
    $region74: #{model_forward.1} parent=1 // pred_check
      _
    $region75: #{model_forward.1} parent=1 // pred_check_branch
      %127 = sbr.rel (0) target = $region77
    $region76: #{model_forward.1} parent=1 // pred_region
      %128 = dma.done [#allocation15], 16
    $region77: #{model_forward.1} parent=1 // pred_fallthru
      _
    // Predicated region
    $region78: #{model_forward.1} parent=1 // pred_check
      _
    $region79: #{model_forward.1} parent=1 // pred_check_branch
      %130 = sbr.rel (0) target = $region81
    $region80: #{model_forward.1} parent=1 // pred_region
      %131 = dma.done [#allocation15], 16
    $region81: #{model_forward.1} parent=1 // pred_fallthru
      _
    %vm132 = vcmask 516096
    %133 = vst.msk [vmem:[#allocation2] sm:$0x1] %vm132, 0.0
    %v134 = vld [vmem:[%s0] sm:$0xff]
    %v135 = vld [vmem:[%s0 + $0x8] sm:$0xff]
    %vm136 = vcmask 523264
    %137 = vst.msk [vmem:[#allocation2 + $0x1] sm:$0xff] %vm136, %v134
    %138 = vst.msk [vmem:[#allocation2 + $0x9] sm:$0xff] %vm136, %v135
    %139 = vst.msk [vmem:[#allocation2 + $0x11] sm:$0x1] %vm132, 0.0
    %140 = vst.msk [vmem:[#allocation2 + $0x12] sm:$0x1] %vm132, 0.0
    %s141 = scalar_lea.vmem %s0, 16
    %v142 = vld [vmem:[%s141] sm:$0xff]
    %v143 = vld [vmem:[%s141 + $0x8] sm:$0xff]
    %144 = vst.msk [vmem:[#allocation2 + $0x13] sm:$0xff] %vm136, %v142
    %145 = vst.msk [vmem:[#allocation2 + $0x1b] sm:$0xff] %vm136, %v143
    %146 = vst.msk [vmem:[#allocation2 + $0x23] sm:$0x1] %vm132, 0.0
    %v147 = vld [vmem:[#allocation2] sm:$0xff]
    %v148 = vld [vmem:[#allocation2 + $0x8] sm:$0xff]
    %v149 = vld [vmem:[#allocation2 + $0x10] sm:$0xff]
    %v150 = vld [vmem:[#allocation2 + $0x18] sm:$0xff]
    %v151 = vld [vmem:[#allocation2 + $0x20] sm:$0xf]
    %v152 = vld [vmem:[%s1] sm:$0xff]
    %v153 = vld [vmem:[%s1 + $0x8] sm:$0xff]
    %v154 = vld [vmem:[%s1 + $0x10] sm:$0xff]
    %v155 = vld [vmem:[%s1 + $0x18] sm:$0xff]
    %v156 = vld [vmem:[%s1 + $0x20] sm:$0xff]
    %v157 = vld [vmem:[%s1 + $0x28] sm:$0xff]
    %v158 = vld [vmem:[%s1 + $0x30] sm:$0xff]
    %v159 = vld [vmem:[%s1 + $0x38] sm:$0xff]
    %v160 = vld [vmem:[%s1 + $0x40] sm:$0xff]
    %v161 = vld [vmem:[%s1 + $0x48] sm:$0xff]
    %v162 = vld [vmem:[%s1 + $0x50] sm:$0xff]
    %v163 = vld [vmem:[%s1 + $0x58] sm:$0xff]
    %v164 = vld [vmem:[%s1 + $0x60] sm:$0xff]
    %v165 = vld [vmem:[%s1 + $0x68] sm:$0xff]
    %v166 = vld [vmem:[%s1 + $0x70] sm:$0xff]
    %v167 = vld [vmem:[%s1 + $0x78] sm:$0xff]
    %v168 = vld [vmem:[%s1 + $0x80] sm:$0xff]
    %v169 = vld [vmem:[%s1 + $0x88] sm:$0xff]
    %v170 = vld [vmem:[%s1 + $0x90] sm:$0xff]
    %v171 = vld [vmem:[%s1 + $0x98] sm:$0xff]
    %v172 = vld [vmem:[%s1 + $0xa0] sm:$0xff]
    %v173 = vld [vmem:[%s1 + $0xa8] sm:$0xff]
    %v174 = vld [vmem:[%s1 + $0xb0] sm:$0xff]
    %v175 = vld [vmem:[%s1 + $0xb8] sm:$0xff]
    %v177 = vsel %vm136, %v147, 0
    %v180 = vsel %vm136, %v148, 0
    %v183 = vsel %vm136, %v149, 0
    %v186 = vsel %vm136, %v150, 0
    %v189 = vsel %vm136, %v151, 0
    %191 = vmatprep.subr.mxu0 0.0
    %192 = vmatpush1.msra.mxu0 0.0
    %193 = vmatprep.subr.mxu0 0.0
    %194 = vmatpush1.msra.mxu0 0.0
    %195 = vmatprep.subr.mxu0 0.0
    %196 = vmatpush1.msra.mxu0 0.0
    %197 = vmatprep.subr.mxu0 0.0
    %198 = vmatpush1.msra.mxu0 0.0
    %199 = vmatprep.subr.mxu0 0.0
    %200 = vmatpush1.msra.mxu0 0.0
    %201 = vmatprep.subr.mxu0 0.0
    %202 = vmatpush1.msra.mxu0 0.0
    %203 = vmatprep.subr.mxu0 0.0
    %204 = vmatpush1.msra.mxu0 0.0
    %205 = vmatprep.subr.mxu0 0.0
    %206 = vmatpush1.msra.mxu0 0.0
    %207 = vmatprep.subr.mxu0 %v174
    %208 = vmatpush1.msra.mxu0 %v173
    %209 = vmatprep.subr.mxu0 %v171
    %210 = vmatpush1.msra.mxu0 %v170
    %211 = vmatprep.subr.mxu0 %v168
    %212 = vmatpush1.msra.mxu0 %v167
    %213 = vmatprep.subr.mxu0 %v165
    %214 = vmatpush1.msra.mxu0 %v164
    %215 = vmatprep.subr.mxu0 %v162
    %216 = vmatpush1.msra.mxu0 %v161
    %217 = vmatprep.subr.mxu0 %v159
    %218 = vmatpush1.msra.mxu0 %v158
    %219 = vmatprep.subr.mxu0 %v156
    %220 = vmatpush1.msra.mxu0 %v155
    %221 = vmatprep.subr.mxu0 %v153
    %222 = vmatpush1.msra.mxu0 %v152
    %223 = vmatprep.subr.mxu0 0.0
    %224 = vmatpush2.msra.mxu0 0.0
    %225 = vmatprep.subr.mxu0 0.0
    %226 = vmatpush2.msra.mxu0 0.0
    %227 = vmatprep.subr.mxu0 0.0
    %228 = vmatpush2.msra.mxu0 0.0
    %229 = vmatprep.subr.mxu0 0.0
    %230 = vmatpush2.msra.mxu0 0.0
    %231 = vmatprep.subr.mxu0 0.0
    %232 = vmatpush2.msra.mxu0 0.0
    %233 = vmatprep.subr.mxu0 0.0
    %234 = vmatpush2.msra.mxu0 0.0
    %235 = vmatprep.subr.mxu0 0.0
    %236 = vmatpush2.msra.mxu0 0.0
    %237 = vmatprep.subr.mxu0 0.0
    %238 = vmatpush2.msra.mxu0 0.0
    %239 = vmatprep.subr.mxu0 0.0
    %240 = vmatpush2.msra.mxu0 0.0
    %241 = vmatprep.subr.mxu0 0.0
    %242 = vmatpush2.msra.mxu0 0.0
    %243 = vmatprep.subr.mxu0 0.0
    %244 = vmatpush2.msra.mxu0 0.0
    %245 = vmatprep.subr.mxu0 0.0
    %246 = vmatpush2.msra.mxu0 0.0
    %247 = vmatprep.subr.mxu0 0.0
    %248 = vmatpush2.msra.mxu0 0.0
    %249 = vmatprep.subr.mxu0 0.0
    %250 = vmatpush2.msra.mxu0 0.0
    %251 = vmatprep.subr.mxu0 0.0
    %252 = vmatpush2.msra.mxu0 0.0
    %253 = vmatprep.subr.mxu0 0.0
    %254 = vmatpush2.msra.mxu0 0.0
    %255 = vmatprep.mubr.f32.mxu0 0.0
    %256 = vmatmul.mubr.f32.gmra.mxu0 %v177
    %v257 = vpop.f32.mrf.mxu0
    %v258 = vadd.f32 0.0, %v257
    %v259 = vpop.f32.mrf.mxu0
    %v260 = vadd.f32 0.0, %v259
    %261 = vmatprep.mubr.f32.mxu0 0.0
    %262 = vmatmul.mubr.f32.gmra.mxu0 %v180
    %v263 = vpop.f32.mrf.mxu0
    %v264 = vadd.f32 0.0, %v263
    %v265 = vpop.f32.mrf.mxu0
    %v266 = vadd.f32 0.0, %v265
    %267 = vmatprep.mubr.f32.mxu0 0.0
    %268 = vmatmul.mubr.f32.gmra.mxu0 %v183
    %v269 = vpop.f32.mrf.mxu0
    %v270 = vadd.f32 0.0, %v269
    %v271 = vpop.f32.mrf.mxu0
    %v272 = vadd.f32 0.0, %v271
    %273 = vmatprep.mubr.f32.mxu0 0.0
    %274 = vmatmul.mubr.f32.gmra.mxu0 %v186
    %v275 = vpop.f32.mrf.mxu0
    %v276 = vadd.f32 0.0, %v275
    %v277 = vpop.f32.mrf.mxu0
    %v278 = vadd.f32 0.0, %v277
    %279 = vmatprep.mubr.f32.mxu0 0.0
    %280 = vmatmul.mubr.f32.gmra.mxu0 %v189
    %v281 = vpop.f32.mrf.mxu0
    %v282 = vadd.f32 0.0, %v281
    %v283 = vpop.f32.mrf.mxu0
    %v284 = vadd.f32 0.0, %v283
    %285 = vdwg.mxu0
    %286 = vmatprep.subr.mxu0 0.0
    %287 = vmatpush1.msra.mxu0 0.0
    %288 = vmatprep.subr.mxu0 0.0
    %289 = vmatpush1.msra.mxu0 0.0
    %290 = vmatprep.subr.mxu0 0.0
    %291 = vmatpush1.msra.mxu0 0.0
    %292 = vmatprep.subr.mxu0 0.0
    %293 = vmatpush1.msra.mxu0 0.0
    %294 = vmatprep.subr.mxu0 0.0
    %295 = vmatpush1.msra.mxu0 0.0
    %296 = vmatprep.subr.mxu0 0.0
    %297 = vmatpush1.msra.mxu0 0.0
    %298 = vmatprep.subr.mxu0 0.0
    %299 = vmatpush1.msra.mxu0 0.0
    %300 = vmatprep.subr.mxu0 0.0
    %301 = vmatpush1.msra.mxu0 0.0
    %302 = vmatprep.subr.mxu0 0.0
    %303 = vmatpush1.msra.mxu0 %v175
    %304 = vmatprep.subr.mxu0 0.0
    %305 = vmatpush1.msra.mxu0 %v172
    %306 = vmatprep.subr.mxu0 0.0
    %307 = vmatpush1.msra.mxu0 %v169
    %308 = vmatprep.subr.mxu0 0.0
    %309 = vmatpush1.msra.mxu0 %v166
    %310 = vmatprep.subr.mxu0 0.0
    %311 = vmatpush1.msra.mxu0 %v163
    %312 = vmatprep.subr.mxu0 0.0
    %313 = vmatpush1.msra.mxu0 %v160
    %314 = vmatprep.subr.mxu0 0.0
    %315 = vmatpush1.msra.mxu0 %v157
    %316 = vmatprep.subr.mxu0 0.0
    %317 = vmatpush1.msra.mxu0 %v154
    %318 = vmatprep.subr.mxu0 0.0
    %319 = vmatpush2.msra.mxu0 0.0
    %320 = vmatprep.subr.mxu0 0.0
    %321 = vmatpush2.msra.mxu0 0.0
    %322 = vmatprep.subr.mxu0 0.0
    %323 = vmatpush2.msra.mxu0 0.0
    %324 = vmatprep.subr.mxu0 0.0
    %325 = vmatpush2.msra.mxu0 0.0
    %326 = vmatprep.subr.mxu0 0.0
    %327 = vmatpush2.msra.mxu0 0.0
    %328 = vmatprep.subr.mxu0 0.0
    %329 = vmatpush2.msra.mxu0 0.0
    %330 = vmatprep.subr.mxu0 0.0
    %331 = vmatpush2.msra.mxu0 0.0
    %332 = vmatprep.subr.mxu0 0.0
    %333 = vmatpush2.msra.mxu0 0.0
    %334 = vmatprep.subr.mxu0 0.0
    %335 = vmatpush2.msra.mxu0 0.0
    %336 = vmatprep.subr.mxu0 0.0
    %337 = vmatpush2.msra.mxu0 0.0
    %338 = vmatprep.subr.mxu0 0.0
    %339 = vmatpush2.msra.mxu0 0.0
    %340 = vmatprep.subr.mxu0 0.0
    %341 = vmatpush2.msra.mxu0 0.0
    %342 = vmatprep.subr.mxu0 0.0
    %343 = vmatpush2.msra.mxu0 0.0
    %344 = vmatprep.subr.mxu0 0.0
    %345 = vmatpush2.msra.mxu0 0.0
    %346 = vmatprep.subr.mxu0 0.0
    %347 = vmatpush2.msra.mxu0 0.0
    %348 = vmatprep.subr.mxu0 0.0
    %349 = vmatpush2.msra.mxu0 0.0
    %350 = vmatprep.mubr.f32.mxu0 0.0
    %351 = vmatmul.mubr.f32.gmra.mxu0 %v177
    %v352 = vpop.f32.mrf.mxu0
    %v353 = vadd.f32 0.0, %v352
    %v354 = vpop.f32.mrf.mxu0
    %355 = vmatprep.mubr.f32.mxu0 0.0
    %356 = vmatmul.mubr.f32.gmra.mxu0 %v180
    %v357 = vpop.f32.mrf.mxu0
    %v358 = vadd.f32 0.0, %v357
    %v359 = vpop.f32.mrf.mxu0
    %360 = vmatprep.mubr.f32.mxu0 0.0
    %361 = vmatmul.mubr.f32.gmra.mxu0 %v183
    %v362 = vpop.f32.mrf.mxu0
    %v363 = vadd.f32 0.0, %v362
    %v364 = vpop.f32.mrf.mxu0
    %365 = vmatprep.mubr.f32.mxu0 0.0
    %366 = vmatmul.mubr.f32.gmra.mxu0 %v186
    %v367 = vpop.f32.mrf.mxu0
    %v368 = vadd.f32 0.0, %v367
    %v369 = vpop.f32.mrf.mxu0
    %370 = vmatprep.mubr.f32.mxu0 0.0
    %371 = vmatmul.mubr.f32.gmra.mxu0 %v189
    %v372 = vpop.f32.mrf.mxu0
    %v373 = vadd.f32 0.0, %v372
    %v374 = vpop.f32.mrf.mxu0
    %375 = vdwg.mxu0
    %vm381 = vcmask 1046528
    %v382 = vrot.slane %v260, 1
    %v383 = vrot.slane %v266, 1
    %v384 = vsel %vm381, %v382, %v383
    %v385 = vrot.slane %v272, 1
    %v386 = vsel %vm381, %v383, %v385
    %v387 = vrot.slane %v278, 1
    %v388 = vsel %vm381, %v385, %v387
    %v389 = vrot.slane %v284, 1
    %v390 = vsel %vm381, %v387, %v389
    %v396 = vadd.f32 %v258, %v384
    %v397 = vadd.f32 %v264, %v386
    %v398 = vadd.f32 %v270, %v388
    %v399 = vadd.f32 %v276, %v390
    %v400 = vadd.f32 %v282, %v389
    %vm406 = vcmask 1045504
    %v407 = vrot.slane %v353, 2
    %v408 = vrot.slane %v358, 2
    %v409 = vsel %vm406, %v407, %v408
    %v410 = vrot.slane %v363, 2
    %v411 = vsel %vm406, %v408, %v410
    %v412 = vrot.slane %v368, 2
    %v413 = vsel %vm406, %v410, %v412
    %v414 = vrot.slane %v373, 2
    %v415 = vsel %vm406, %v412, %v414
    %v421 = vadd.f32 %v396, %v409
    %v422 = vadd.f32 %v397, %v411
    %v423 = vadd.f32 %v398, %v413
    %v424 = vadd.f32 %v399, %v415
    %v425 = vadd.f32 %v400, %v414
    %v426 = vld [vmem:[#allocation5] sm:$0x1]
    %v428 = vlaneseq
    %v429 = vshrl.u32 %v428, 7
    %v430 = vsub.s32 0, %v429
    %v431 = vrot.slane %v426, %v430
    %v433 = vadd.f32 %v421, %v431
    %v434 = vadd.f32 %v422, %v431
    %v435 = vadd.f32 %v423, %v431
    %v436 = vadd.f32 %v424, %v431
    %v437 = vadd.f32 %v425, %v431
    %v438 = vmax.f32 %v433, 0.0
    %v439 = vmax.f32 %v434, 0.0
    %v440 = vmax.f32 %v435, 0.0
    %v441 = vmax.f32 %v436, 0.0
    %v442 = vmax.f32 %v437, 0.0
    %v448 = vcombine.high %v438, %v438
    %v450 = vunpack.c.l.s4 1983009808
    %v451 = vunpack.c.0.s8 %v450
    %v452 = vlaneseq
    %v453 = vshrl.u32 %v452, 7
    %v454 = vsub.s32 %v451, %v453
    %v455 = vrot.slane %v438, %v454
    %v457 = vunpack.c.l.s4 1983009808
    %v458 = vunpack.c.0.s8 %v457
    %v459 = vlaneseq
    %v460 = vshrl.u32 %v459, 7
    %v461 = vsub.s32 %v458, %v460
    %v462 = vrot.slane %v448, %v461
    %v463 = vcombine.high %v455, %v455
    %v464 = vcombine.high %v462, %v462
    %v465 = vcombine.high %v439, %v439
    %v467 = vunpack.c.l.s4 1983009808
    %v468 = vunpack.c.0.s8 %v467
    %v469 = vlaneseq
    %v470 = vshrl.u32 %v469, 7
    %v471 = vsub.s32 %v468, %v470
    %v472 = vrot.slane %v439, %v471
    %v474 = vunpack.c.l.s4 1983009808
    %v475 = vunpack.c.0.s8 %v474
    %v476 = vlaneseq
    %v477 = vshrl.u32 %v476, 7
    %v478 = vsub.s32 %v475, %v477
    %v479 = vrot.slane %v465, %v478
    %v480 = vcombine.high %v472, %v472
    %v481 = vcombine.high %v479, %v479
    %v482 = vcombine.high %v440, %v440
    %v484 = vunpack.c.l.s4 1983009808
    %v485 = vunpack.c.0.s8 %v484
    %v486 = vlaneseq
    %v487 = vshrl.u32 %v486, 7
    %v488 = vsub.s32 %v485, %v487
    %v489 = vrot.slane %v440, %v488
    %v491 = vunpack.c.l.s4 1983009808
    %v492 = vunpack.c.0.s8 %v491
    %v493 = vlaneseq
    %v494 = vshrl.u32 %v493, 7
    %v495 = vsub.s32 %v492, %v494
    %v496 = vrot.slane %v482, %v495
    %v497 = vcombine.high %v489, %v489
    %v498 = vcombine.high %v496, %v496
    %v499 = vcombine.high %v441, %v441
    %v501 = vunpack.c.l.s4 1983009808
    %v502 = vunpack.c.0.s8 %v501
    %v503 = vlaneseq
    %v504 = vshrl.u32 %v503, 7
    %v505 = vsub.s32 %v502, %v504
    %v506 = vrot.slane %v441, %v505
    %v508 = vunpack.c.l.s4 1983009808
    %v509 = vunpack.c.0.s8 %v508
    %v510 = vlaneseq
    %v511 = vshrl.u32 %v510, 7
    %v512 = vsub.s32 %v509, %v511
    %v513 = vrot.slane %v499, %v512
    %v514 = vcombine.high %v506, %v506
    %v515 = vcombine.high %v513, %v513
    %v517 = vunpack.c.l.s4 1983009808
    %v518 = vunpack.c.0.s8 %v517
    %v519 = vlaneseq
    %v520 = vshrl.u32 %v519, 7
    %v521 = vsub.s32 %v518, %v520
    %v522 = vrot.slane %v442, %v521
    %vm540 = vcmask 1041408
    %v541 = vsel %vm540, %v455, -inf
    %v542 = vrot.slane %v541, 4
    %v543 = vmax.f32 %v541, %v542
    %v544 = vrot.slane %v543, 2
    %v545 = vmax.f32 %v543, %v544
    %v546 = vrot.slane %v545, 1
    %v547 = vmax.f32 %v545, %v546
    %v548 = vsel %vm540, %v463, -inf
    %v549 = vrot.slane %v548, 4
    %v550 = vmax.f32 %v548, %v549
    %v551 = vrot.slane %v550, 2
    %v552 = vmax.f32 %v550, %v551
    %v553 = vrot.slane %v552, 1
    %v554 = vmax.f32 %v552, %v553
    %v555 = vsel %vm540, %v462, -inf
    %v556 = vrot.slane %v555, 4
    %v557 = vmax.f32 %v555, %v556
    %v558 = vrot.slane %v557, 2
    %v559 = vmax.f32 %v557, %v558
    %v560 = vrot.slane %v559, 1
    %v561 = vmax.f32 %v559, %v560
    %v562 = vsel %vm540, %v464, -inf
    %v563 = vrot.slane %v562, 4
    %v564 = vmax.f32 %v562, %v563
    %v565 = vrot.slane %v564, 2
    %v566 = vmax.f32 %v564, %v565
    %v567 = vrot.slane %v566, 1
    %v568 = vmax.f32 %v566, %v567
    %v569 = vsel %vm540, %v472, -inf
    %v570 = vrot.slane %v569, 4
    %v571 = vmax.f32 %v569, %v570
    %v572 = vrot.slane %v571, 2
    %v573 = vmax.f32 %v571, %v572
    %v574 = vrot.slane %v573, 1
    %v575 = vmax.f32 %v573, %v574
    %v576 = vsel %vm540, %v480, -inf
    %v577 = vrot.slane %v576, 4
    %v578 = vmax.f32 %v576, %v577
    %v579 = vrot.slane %v578, 2
    %v580 = vmax.f32 %v578, %v579
    %v581 = vrot.slane %v580, 1
    %v582 = vmax.f32 %v580, %v581
    %v583 = vsel %vm540, %v479, -inf
    %v584 = vrot.slane %v583, 4
    %v585 = vmax.f32 %v583, %v584
    %v586 = vrot.slane %v585, 2
    %v587 = vmax.f32 %v585, %v586
    %v588 = vrot.slane %v587, 1
    %v589 = vmax.f32 %v587, %v588
    %v590 = vsel %vm540, %v481, -inf
    %v591 = vrot.slane %v590, 4
    %v592 = vmax.f32 %v590, %v591
    %v593 = vrot.slane %v592, 2
    %v594 = vmax.f32 %v592, %v593
    %v595 = vrot.slane %v594, 1
    %v596 = vmax.f32 %v594, %v595
    %v597 = vsel %vm540, %v489, -inf
    %v598 = vrot.slane %v597, 4
    %v599 = vmax.f32 %v597, %v598
    %v600 = vrot.slane %v599, 2
    %v601 = vmax.f32 %v599, %v600
    %v602 = vrot.slane %v601, 1
    %v603 = vmax.f32 %v601, %v602
    %v604 = vsel %vm540, %v497, -inf
    %v605 = vrot.slane %v604, 4
    %v606 = vmax.f32 %v604, %v605
    %v607 = vrot.slane %v606, 2
    %v608 = vmax.f32 %v606, %v607
    %v609 = vrot.slane %v608, 1
    %v610 = vmax.f32 %v608, %v609
    %v611 = vsel %vm540, %v496, -inf
    %v612 = vrot.slane %v611, 4
    %v613 = vmax.f32 %v611, %v612
    %v614 = vrot.slane %v613, 2
    %v615 = vmax.f32 %v613, %v614
    %v616 = vrot.slane %v615, 1
    %v617 = vmax.f32 %v615, %v616
    %v618 = vsel %vm540, %v498, -inf
    %v619 = vrot.slane %v618, 4
    %v620 = vmax.f32 %v618, %v619
    %v621 = vrot.slane %v620, 2
    %v622 = vmax.f32 %v620, %v621
    %v623 = vrot.slane %v622, 1
    %v624 = vmax.f32 %v622, %v623
    %v625 = vsel %vm540, %v506, -inf
    %v626 = vrot.slane %v625, 4
    %v627 = vmax.f32 %v625, %v626
    %v628 = vrot.slane %v627, 2
    %v629 = vmax.f32 %v627, %v628
    %v630 = vrot.slane %v629, 1
    %v631 = vmax.f32 %v629, %v630
    %v632 = vsel %vm540, %v514, -inf
    %v633 = vrot.slane %v632, 4
    %v634 = vmax.f32 %v632, %v633
    %v635 = vrot.slane %v634, 2
    %v636 = vmax.f32 %v634, %v635
    %v637 = vrot.slane %v636, 1
    %v638 = vmax.f32 %v636, %v637
    %v639 = vsel %vm540, %v513, -inf
    %v640 = vrot.slane %v639, 4
    %v641 = vmax.f32 %v639, %v640
    %v642 = vrot.slane %v641, 2
    %v643 = vmax.f32 %v641, %v642
    %v644 = vrot.slane %v643, 1
    %v645 = vmax.f32 %v643, %v644
    %v646 = vsel %vm540, %v515, -inf
    %v647 = vrot.slane %v646, 4
    %v648 = vmax.f32 %v646, %v647
    %v649 = vrot.slane %v648, 2
    %v650 = vmax.f32 %v648, %v649
    %v651 = vrot.slane %v650, 1
    %v652 = vmax.f32 %v650, %v651
    %v653 = vsel %vm540, %v522, -inf
    %v654 = vrot.slane %v653, 4
    %v655 = vmax.f32 %v653, %v654
    %v656 = vrot.slane %v655, 2
    %v657 = vmax.f32 %v655, %v656
    %v658 = vrot.slane %v657, 1
    %v659 = vmax.f32 %v657, %v658
    %v660 = vld [vmem:[#allocation8] sm:$0xff]
    %v661 = vld [vmem:[#allocation8 + $0x8] sm:$0xff]
    %v662 = vld [vmem:[#allocation8 + $0x10] sm:$0xff]
    %v663 = vld [vmem:[#allocation8 + $0x18] sm:$0xff]
    %v664 = vld [vmem:[#allocation8 + $0x20] sm:$0xff]
    %v665 = vld [vmem:[#allocation8 + $0x28] sm:$0xff]
    %v666 = vld [vmem:[#allocation8 + $0x30] sm:$0xff]
    %v667 = vld [vmem:[#allocation8 + $0x38] sm:$0xff]
    %v668 = vld [vmem:[#allocation8 + $0x40] sm:$0xff]
    %v669 = vld [vmem:[#allocation8 + $0x48] sm:$0xff]
    %v670 = vld [vmem:[#allocation8 + $0x50] sm:$0xff]
    %v671 = vld [vmem:[#allocation8 + $0x58] sm:$0xff]
    %v672 = vld [vmem:[#allocation8 + $0x60] sm:$0xff]
    %v673 = vld [vmem:[#allocation8 + $0x68] sm:$0xff]
    %v674 = vld [vmem:[#allocation8 + $0x70] sm:$0xff]
    %v675 = vld [vmem:[#allocation8 + $0x78] sm:$0xff]
    %vm693 = vcmask 1041409
    %v694 = vsel %vm693, %v554, %v547
    %vm695 = vcmask 1042434
    %v696 = vsel %vm695, %v561, %v694
    %vm697 = vcmask 1043459
    %v698 = vsel %vm697, %v568, %v696
    %vm699 = vcmask 1044484
    %v700 = vsel %vm699, %v575, %v698
    %vm701 = vcmask 1045509
    %v702 = vsel %vm701, %v582, %v700
    %vm703 = vcmask 1046534
    %v704 = vsel %vm703, %v589, %v702
    %vm705 = vcmask 1047559
    %v706 = vsel %vm705, %v596, %v704
    %v707 = vsel %vm693, %v610, %v603
    %v708 = vsel %vm695, %v617, %v707
    %v709 = vsel %vm697, %v624, %v708
    %v710 = vsel %vm699, %v631, %v709
    %v711 = vsel %vm701, %v638, %v710
    %v712 = vsel %vm703, %v645, %v711
    %v713 = vsel %vm705, %v652, %v712
    %717 = vmatprep.subr.mxu0 0.0
    %718 = vmatpush1.msra.mxu0 %v675
    %719 = vmatprep.subr.mxu0 0.0
    %720 = vmatpush1.msra.mxu0 %v674
    %721 = vmatprep.subr.mxu0 0.0
    %722 = vmatpush1.msra.mxu0 %v673
    %723 = vmatprep.subr.mxu0 0.0
    %724 = vmatpush1.msra.mxu0 %v672
    %725 = vmatprep.subr.mxu0 0.0
    %726 = vmatpush1.msra.mxu0 %v671
    %727 = vmatprep.subr.mxu0 0.0
    %728 = vmatpush1.msra.mxu0 %v670
    %729 = vmatprep.subr.mxu0 0.0
    %730 = vmatpush1.msra.mxu0 %v669
    %731 = vmatprep.subr.mxu0 0.0
    %732 = vmatpush1.msra.mxu0 %v668
    %733 = vmatprep.subr.mxu0 0.0
    %734 = vmatpush1.msra.mxu0 %v667
    %735 = vmatprep.subr.mxu0 0.0
    %736 = vmatpush1.msra.mxu0 %v666
    %737 = vmatprep.subr.mxu0 0.0
    %738 = vmatpush1.msra.mxu0 %v665
    %739 = vmatprep.subr.mxu0 0.0
    %740 = vmatpush1.msra.mxu0 %v664
    %741 = vmatprep.subr.mxu0 0.0
    %742 = vmatpush1.msra.mxu0 %v663
    %743 = vmatprep.subr.mxu0 0.0
    %744 = vmatpush1.msra.mxu0 %v662
    %745 = vmatprep.subr.mxu0 0.0
    %746 = vmatpush1.msra.mxu0 %v661
    %747 = vmatprep.subr.mxu0 0.0
    %748 = vmatpush1.msra.mxu0 %v660
    %749 = vmatprep.subr.mxu0 0.0
    %750 = vmatpush2.msra.mxu0 0.0
    %751 = vmatprep.subr.mxu0 0.0
    %752 = vmatpush2.msra.mxu0 0.0
    %753 = vmatprep.subr.mxu0 0.0
    %754 = vmatpush2.msra.mxu0 0.0
    %755 = vmatprep.subr.mxu0 0.0
    %756 = vmatpush2.msra.mxu0 0.0
    %757 = vmatprep.subr.mxu0 0.0
    %758 = vmatpush2.msra.mxu0 0.0
    %759 = vmatprep.subr.mxu0 0.0
    %760 = vmatpush2.msra.mxu0 0.0
    %761 = vmatprep.subr.mxu0 0.0
    %762 = vmatpush2.msra.mxu0 0.0
    %763 = vmatprep.subr.mxu0 0.0
    %764 = vmatpush2.msra.mxu0 0.0
    %765 = vmatprep.subr.mxu0 0.0
    %766 = vmatpush2.msra.mxu0 0.0
    %767 = vmatprep.subr.mxu0 0.0
    %768 = vmatpush2.msra.mxu0 0.0
    %769 = vmatprep.subr.mxu0 0.0
    %770 = vmatpush2.msra.mxu0 0.0
    %771 = vmatprep.subr.mxu0 0.0
    %772 = vmatpush2.msra.mxu0 0.0
    %773 = vmatprep.subr.mxu0 0.0
    %774 = vmatpush2.msra.mxu0 0.0
    %775 = vmatprep.subr.mxu0 0.0
    %776 = vmatpush2.msra.mxu0 0.0
    %777 = vmatprep.subr.mxu0 0.0
    %778 = vmatpush2.msra.mxu0 0.0
    %779 = vmatprep.subr.mxu0 0.0
    %780 = vmatpush2.msra.mxu0 0.0
    %781 = vmatprep.mubr.f32.mxu0 0.0
    %782 = vmatmul.mubr.f32.gmra.mxu0 %v706
    %v783 = vpop.f32.mrf.mxu0
    %v784 = vadd.f32 0.0, %v783
    %v785 = vpop.f32.mrf.mxu0
    %786 = vmatprep.mubr.f32.mxu0 0.0
    %787 = vmatmul.mubr.f32.gmra.mxu0 %v713
    %v788 = vpop.f32.mrf.mxu0
    %v789 = vadd.f32 0.0, %v788
    %v790 = vpop.f32.mrf.mxu0
    %791 = vmatprep.mubr.f32.mxu0 0.0
    %792 = vmatmul.mubr.f32.gmra.mxu0 %v659
    %v793 = vpop.f32.mrf.mxu0
    %v794 = vadd.f32 0.0, %v793
    %v795 = vpop.f32.mrf.mxu0
    %796 = vdwg.mxu0
    %800 = vrot.lane.b32.xlu0 %v784, 64
    %v801 = vpop.permute.xlu0 %800
    %802 = vrot.lane.b32.xlu0 %v789, 64
    %v803 = vpop.permute.xlu0 %802
    %804 = vrot.lane.b32.xlu0 %v794, 64
    %v805 = vpop.permute.xlu0 %804
    %v809 = vmax.f32 %v784, %v801
    %v810 = vmax.f32 %v789, %v803
    %v811 = vmax.f32 %v794, %v805
    %812 = vst.msk [vmem:[#allocation3] sm:$0x1] %vm132, 0.0
    %813 = vst.msk [vmem:[#allocation3 + $0x1] sm:$0xff] %vm136, %v809
    %814 = vst.msk [vmem:[#allocation3 + $0x9] sm:$0x1] %vm132, 0.0
    %815 = vst.msk [vmem:[#allocation3 + $0xa] sm:$0x1] %vm132, 0.0
    %vm816 = vcmask 523265
    %817 = vst.msk [vmem:[#allocation3 + $0xa] sm:$0xfe] %vm816, %v810
    %818 = vst.msk [vmem:[#allocation3 + $0x12] sm:$0x1] %vm132, %v811
    %819 = vst.msk [vmem:[#allocation3 + $0x13] sm:$0x1] %vm132, 0.0
    %v820 = vld [vmem:[#allocation3] sm:$0xff]
    %v821 = vld [vmem:[#allocation3 + $0x8] sm:$0xff]
    %v822 = vld [vmem:[#allocation3 + $0x10] sm:$0xf]
    %v823 = vld [vmem:[%s4] sm:$0xff]
    %v824 = vld [vmem:[%s4 + $0x8] sm:$0xff]
    %v825 = vld [vmem:[%s4 + $0x10] sm:$0xff]
    %v826 = vld [vmem:[%s4 + $0x18] sm:$0xff]
    %v827 = vld [vmem:[%s4 + $0x20] sm:$0xff]
    %v828 = vld [vmem:[%s4 + $0x28] sm:$0xff]
    %v829 = vld [vmem:[%s4 + $0x30] sm:$0xff]
    %v830 = vld [vmem:[%s4 + $0x38] sm:$0xff]
    %v831 = vld [vmem:[%s4 + $0x40] sm:$0xff]
    %v832 = vld [vmem:[%s4 + $0x48] sm:$0xff]
    %v833 = vld [vmem:[%s4 + $0x50] sm:$0xff]
    %v834 = vld [vmem:[%s4 + $0x58] sm:$0xff]
    %v835 = vld [vmem:[%s4 + $0x60] sm:$0xff]
    %v836 = vld [vmem:[%s4 + $0x68] sm:$0xff]
    %v837 = vld [vmem:[%s4 + $0x70] sm:$0xff]
    %v838 = vld [vmem:[%s4 + $0x78] sm:$0xff]
    %v839 = vld [vmem:[%s4 + $0x80] sm:$0xff]
    %v840 = vld [vmem:[%s4 + $0x88] sm:$0xff]
    %v841 = vld [vmem:[%s4 + $0x90] sm:$0xff]
    %v842 = vld [vmem:[%s4 + $0x98] sm:$0xff]
    %v843 = vld [vmem:[%s4 + $0xa0] sm:$0xff]
    %v844 = vld [vmem:[%s4 + $0xa8] sm:$0xff]
    %v845 = vld [vmem:[%s4 + $0xb0] sm:$0xff]
    %v846 = vld [vmem:[%s4 + $0xb8] sm:$0xff]
    %v848 = vsel %vm136, %v820, 0
    %v851 = vsel %vm136, %v821, 0
    %v854 = vsel %vm136, %v822, 0
    %856 = vmatprep.subr.mxu0 0.0
    %857 = vmatpush1.msra.mxu0 0.0
    %858 = vmatprep.subr.mxu0 0.0
    %859 = vmatpush1.msra.mxu0 0.0
    %860 = vmatprep.subr.mxu0 0.0
    %861 = vmatpush1.msra.mxu0 0.0
    %862 = vmatprep.subr.mxu0 0.0
    %863 = vmatpush1.msra.mxu0 0.0
    %864 = vmatprep.subr.mxu0 0.0
    %865 = vmatpush1.msra.mxu0 0.0
    %866 = vmatprep.subr.mxu0 0.0
    %867 = vmatpush1.msra.mxu0 0.0
    %868 = vmatprep.subr.mxu0 0.0
    %869 = vmatpush1.msra.mxu0 0.0
    %870 = vmatprep.subr.mxu0 0.0
    %871 = vmatpush1.msra.mxu0 0.0
    %872 = vmatprep.subr.mxu0 %v845
    %873 = vmatpush1.msra.mxu0 %v844
    %874 = vmatprep.subr.mxu0 %v842
    %875 = vmatpush1.msra.mxu0 %v841
    %876 = vmatprep.subr.mxu0 %v839
    %877 = vmatpush1.msra.mxu0 %v838
    %878 = vmatprep.subr.mxu0 %v836
    %879 = vmatpush1.msra.mxu0 %v835
    %880 = vmatprep.subr.mxu0 %v833
    %881 = vmatpush1.msra.mxu0 %v832
    %882 = vmatprep.subr.mxu0 %v830
    %883 = vmatpush1.msra.mxu0 %v829
    %884 = vmatprep.subr.mxu0 %v827
    %885 = vmatpush1.msra.mxu0 %v826
    %886 = vmatprep.subr.mxu0 %v824
    %887 = vmatpush1.msra.mxu0 %v823
    %888 = vmatprep.subr.mxu0 0.0
    %889 = vmatpush2.msra.mxu0 0.0
    %890 = vmatprep.subr.mxu0 0.0
    %891 = vmatpush2.msra.mxu0 0.0
    %892 = vmatprep.subr.mxu0 0.0
    %893 = vmatpush2.msra.mxu0 0.0
    %894 = vmatprep.subr.mxu0 0.0
    %895 = vmatpush2.msra.mxu0 0.0
    %896 = vmatprep.subr.mxu0 0.0
    %897 = vmatpush2.msra.mxu0 0.0
    %898 = vmatprep.subr.mxu0 0.0
    %899 = vmatpush2.msra.mxu0 0.0
    %900 = vmatprep.subr.mxu0 0.0
    %901 = vmatpush2.msra.mxu0 0.0
    %902 = vmatprep.subr.mxu0 0.0
    %903 = vmatpush2.msra.mxu0 0.0
    %904 = vmatprep.subr.mxu0 0.0
    %905 = vmatpush2.msra.mxu0 0.0
    %906 = vmatprep.subr.mxu0 0.0
    %907 = vmatpush2.msra.mxu0 0.0
    %908 = vmatprep.subr.mxu0 0.0
    %909 = vmatpush2.msra.mxu0 0.0
    %910 = vmatprep.subr.mxu0 0.0
    %911 = vmatpush2.msra.mxu0 0.0
    %912 = vmatprep.subr.mxu0 0.0
    %913 = vmatpush2.msra.mxu0 0.0
    %914 = vmatprep.subr.mxu0 0.0
    %915 = vmatpush2.msra.mxu0 0.0
    %916 = vmatprep.subr.mxu0 0.0
    %917 = vmatpush2.msra.mxu0 0.0
    %918 = vmatprep.subr.mxu0 0.0
    %919 = vmatpush2.msra.mxu0 0.0
    %920 = vmatprep.mubr.f32.mxu0 0.0
    %921 = vmatmul.mubr.f32.gmra.mxu0 %v848
    %v922 = vpop.f32.mrf.mxu0
    %v923 = vadd.f32 0.0, %v922
    %v924 = vpop.f32.mrf.mxu0
    %v925 = vadd.f32 0.0, %v924
    %926 = vmatprep.mubr.f32.mxu0 0.0
    %927 = vmatmul.mubr.f32.gmra.mxu0 %v851
    %v928 = vpop.f32.mrf.mxu0
    %v929 = vadd.f32 0.0, %v928
    %v930 = vpop.f32.mrf.mxu0
    %v931 = vadd.f32 0.0, %v930
    %932 = vmatprep.mubr.f32.mxu0 0.0
    %933 = vmatmul.mubr.f32.gmra.mxu0 %v854
    %v934 = vpop.f32.mrf.mxu0
    %v935 = vadd.f32 0.0, %v934
    %v936 = vpop.f32.mrf.mxu0
    %v937 = vadd.f32 0.0, %v936
    %938 = vdwg.mxu0
    %939 = vmatprep.subr.mxu0 0.0
    %940 = vmatpush1.msra.mxu0 0.0
    %941 = vmatprep.subr.mxu0 0.0
    %942 = vmatpush1.msra.mxu0 0.0
    %943 = vmatprep.subr.mxu0 0.0
    %944 = vmatpush1.msra.mxu0 0.0
    %945 = vmatprep.subr.mxu0 0.0
    %946 = vmatpush1.msra.mxu0 0.0
    %947 = vmatprep.subr.mxu0 0.0
    %948 = vmatpush1.msra.mxu0 0.0
    %949 = vmatprep.subr.mxu0 0.0
    %950 = vmatpush1.msra.mxu0 0.0
    %951 = vmatprep.subr.mxu0 0.0
    %952 = vmatpush1.msra.mxu0 0.0
    %953 = vmatprep.subr.mxu0 0.0
    %954 = vmatpush1.msra.mxu0 0.0
    %955 = vmatprep.subr.mxu0 0.0
    %956 = vmatpush1.msra.mxu0 %v846
    %957 = vmatprep.subr.mxu0 0.0
    %958 = vmatpush1.msra.mxu0 %v843
    %959 = vmatprep.subr.mxu0 0.0
    %960 = vmatpush1.msra.mxu0 %v840
    %961 = vmatprep.subr.mxu0 0.0
    %962 = vmatpush1.msra.mxu0 %v837
    %963 = vmatprep.subr.mxu0 0.0
    %964 = vmatpush1.msra.mxu0 %v834
    %965 = vmatprep.subr.mxu0 0.0
    %966 = vmatpush1.msra.mxu0 %v831
    %967 = vmatprep.subr.mxu0 0.0
    %968 = vmatpush1.msra.mxu0 %v828
    %969 = vmatprep.subr.mxu0 0.0
    %970 = vmatpush1.msra.mxu0 %v825
    %971 = vmatprep.subr.mxu0 0.0
    %972 = vmatpush2.msra.mxu0 0.0
    %973 = vmatprep.subr.mxu0 0.0
    %974 = vmatpush2.msra.mxu0 0.0
    %975 = vmatprep.subr.mxu0 0.0
    %976 = vmatpush2.msra.mxu0 0.0
    %977 = vmatprep.subr.mxu0 0.0
    %978 = vmatpush2.msra.mxu0 0.0
    %979 = vmatprep.subr.mxu0 0.0
    %980 = vmatpush2.msra.mxu0 0.0
    %981 = vmatprep.subr.mxu0 0.0
    %982 = vmatpush2.msra.mxu0 0.0
    %983 = vmatprep.subr.mxu0 0.0
    %984 = vmatpush2.msra.mxu0 0.0
    %985 = vmatprep.subr.mxu0 0.0
    %986 = vmatpush2.msra.mxu0 0.0
    %987 = vmatprep.subr.mxu0 0.0
    %988 = vmatpush2.msra.mxu0 0.0
    %989 = vmatprep.subr.mxu0 0.0
    %990 = vmatpush2.msra.mxu0 0.0
    %991 = vmatprep.subr.mxu0 0.0
    %992 = vmatpush2.msra.mxu0 0.0
    %993 = vmatprep.subr.mxu0 0.0
    %994 = vmatpush2.msra.mxu0 0.0
    %995 = vmatprep.subr.mxu0 0.0
    %996 = vmatpush2.msra.mxu0 0.0
    %997 = vmatprep.subr.mxu0 0.0
    %998 = vmatpush2.msra.mxu0 0.0
    %999 = vmatprep.subr.mxu0 0.0
    %1000 = vmatpush2.msra.mxu0 0.0
    %1001 = vmatprep.subr.mxu0 0.0
    %1002 = vmatpush2.msra.mxu0 0.0
    %1003 = vmatprep.mubr.f32.mxu0 0.0
    %1004 = vmatmul.mubr.f32.gmra.mxu0 %v848
    %v1005 = vpop.f32.mrf.mxu0
    %v1006 = vadd.f32 0.0, %v1005
    %v1007 = vpop.f32.mrf.mxu0
    %1008 = vmatprep.mubr.f32.mxu0 0.0
    %1009 = vmatmul.mubr.f32.gmra.mxu0 %v851
    %v1010 = vpop.f32.mrf.mxu0
    %v1011 = vadd.f32 0.0, %v1010
    %v1012 = vpop.f32.mrf.mxu0
    %1013 = vmatprep.mubr.f32.mxu0 0.0
    %1014 = vmatmul.mubr.f32.gmra.mxu0 %v854
    %v1015 = vpop.f32.mrf.mxu0
    %v1016 = vadd.f32 0.0, %v1015
    %v1017 = vpop.f32.mrf.mxu0
    %1018 = vdwg.mxu0
    %v1022 = vrot.slane %v925, 1
    %v1023 = vrot.slane %v931, 1
    %v1024 = vsel %vm381, %v1022, %v1023
    %v1025 = vrot.slane %v937, 1
    %v1026 = vsel %vm381, %v1023, %v1025
    %v1030 = vadd.f32 %v923, %v1024
    %v1031 = vadd.f32 %v929, %v1026
    %v1032 = vadd.f32 %v935, %v1025
    %v1036 = vrot.slane %v1006, 2
    %v1037 = vrot.slane %v1011, 2
    %v1038 = vsel %vm406, %v1036, %v1037
    %v1039 = vrot.slane %v1016, 2
    %v1040 = vsel %vm406, %v1037, %v1039
    %v1044 = vadd.f32 %v1030, %v1038
    %v1045 = vadd.f32 %v1031, %v1040
    %v1046 = vadd.f32 %v1032, %v1039
    %v1047 = vld [vmem:[#allocation10] sm:$0x1]
    %v1049 = vlaneseq
    %v1050 = vshrl.u32 %v1049, 7
    %v1051 = vsub.s32 0, %v1050
    %v1052 = vrot.slane %v1047, %v1051
    %v1054 = vadd.f32 %v1044, %v1052
    %v1055 = vadd.f32 %v1045, %v1052
    %v1056 = vadd.f32 %v1046, %v1052
    %v1060 = vcombine.high %v1054, %v1054
    %v1062 = vunpack.c.l.s4 1983009808
    %v1063 = vunpack.c.0.s8 %v1062
    %v1064 = vlaneseq
    %v1065 = vshrl.u32 %v1064, 7
    %v1066 = vsub.s32 %v1063, %v1065
    %v1067 = vrot.slane %v1054, %v1066
    %v1069 = vunpack.c.l.s4 1983009808
    %v1070 = vunpack.c.0.s8 %v1069
    %v1071 = vlaneseq
    %v1072 = vshrl.u32 %v1071, 7
    %v1073 = vsub.s32 %v1070, %v1072
    %v1074 = vrot.slane %v1060, %v1073
    %v1075 = vcombine.high %v1067, %v1067
    %v1076 = vcombine.high %v1074, %v1074
    %v1077 = vcombine.high %v1055, %v1055
    %v1079 = vunpack.c.l.s4 1983009808
    %v1080 = vunpack.c.0.s8 %v1079
    %v1081 = vlaneseq
    %v1082 = vshrl.u32 %v1081, 7
    %v1083 = vsub.s32 %v1080, %v1082
    %v1084 = vrot.slane %v1055, %v1083
    %v1086 = vunpack.c.l.s4 1983009808
    %v1087 = vunpack.c.0.s8 %v1086
    %v1088 = vlaneseq
    %v1089 = vshrl.u32 %v1088, 7
    %v1090 = vsub.s32 %v1087, %v1089
    %v1091 = vrot.slane %v1077, %v1090
    %v1092 = vcombine.high %v1084, %v1084
    %v1093 = vcombine.high %v1091, %v1091
    %v1095 = vunpack.c.l.s4 1983009808
    %v1096 = vunpack.c.0.s8 %v1095
    %v1097 = vlaneseq
    %v1098 = vshrl.u32 %v1097, 7
    %v1099 = vsub.s32 %v1096, %v1098
    %v1100 = vrot.slane %v1056, %v1099
    %v1110 = vsel %vm540, %v1067, -inf
    %v1111 = vrot.slane %v1110, 4
    %v1112 = vmax.f32 %v1110, %v1111
    %v1113 = vrot.slane %v1112, 2
    %v1114 = vmax.f32 %v1112, %v1113
    %v1115 = vrot.slane %v1114, 1
    %v1116 = vmax.f32 %v1114, %v1115
    %v1117 = vsel %vm540, %v1075, -inf
    %v1118 = vrot.slane %v1117, 4
    %v1119 = vmax.f32 %v1117, %v1118
    %v1120 = vrot.slane %v1119, 2
    %v1121 = vmax.f32 %v1119, %v1120
    %v1122 = vrot.slane %v1121, 1
    %v1123 = vmax.f32 %v1121, %v1122
    %v1124 = vsel %vm540, %v1074, -inf
    %v1125 = vrot.slane %v1124, 4
    %v1126 = vmax.f32 %v1124, %v1125
    %v1127 = vrot.slane %v1126, 2
    %v1128 = vmax.f32 %v1126, %v1127
    %v1129 = vrot.slane %v1128, 1
    %v1130 = vmax.f32 %v1128, %v1129
    %v1131 = vsel %vm540, %v1076, -inf
    %v1132 = vrot.slane %v1131, 4
    %v1133 = vmax.f32 %v1131, %v1132
    %v1134 = vrot.slane %v1133, 2
    %v1135 = vmax.f32 %v1133, %v1134
    %v1136 = vrot.slane %v1135, 1
    %v1137 = vmax.f32 %v1135, %v1136
    %v1138 = vsel %vm540, %v1084, -inf
    %v1139 = vrot.slane %v1138, 4
    %v1140 = vmax.f32 %v1138, %v1139
    %v1141 = vrot.slane %v1140, 2
    %v1142 = vmax.f32 %v1140, %v1141
    %v1143 = vrot.slane %v1142, 1
    %v1144 = vmax.f32 %v1142, %v1143
    %v1145 = vsel %vm540, %v1092, -inf
    %v1146 = vrot.slane %v1145, 4
    %v1147 = vmax.f32 %v1145, %v1146
    %v1148 = vrot.slane %v1147, 2
    %v1149 = vmax.f32 %v1147, %v1148
    %v1150 = vrot.slane %v1149, 1
    %v1151 = vmax.f32 %v1149, %v1150
    %v1152 = vsel %vm540, %v1091, -inf
    %v1153 = vrot.slane %v1152, 4
    %v1154 = vmax.f32 %v1152, %v1153
    %v1155 = vrot.slane %v1154, 2
    %v1156 = vmax.f32 %v1154, %v1155
    %v1157 = vrot.slane %v1156, 1
    %v1158 = vmax.f32 %v1156, %v1157
    %v1159 = vsel %vm540, %v1093, -inf
    %v1160 = vrot.slane %v1159, 4
    %v1161 = vmax.f32 %v1159, %v1160
    %v1162 = vrot.slane %v1161, 2
    %v1163 = vmax.f32 %v1161, %v1162
    %v1164 = vrot.slane %v1163, 1
    %v1165 = vmax.f32 %v1163, %v1164
    %v1166 = vsel %vm540, %v1100, -inf
    %v1167 = vrot.slane %v1166, 4
    %v1168 = vmax.f32 %v1166, %v1167
    %v1169 = vrot.slane %v1168, 2
    %v1170 = vmax.f32 %v1168, %v1169
    %v1171 = vrot.slane %v1170, 1
    %v1172 = vmax.f32 %v1170, %v1171
    %v1173 = vld [vmem:[#allocation11] sm:$0xff]
    %v1174 = vld [vmem:[#allocation11 + $0x8] sm:$0xff]
    %v1175 = vld [vmem:[#allocation11 + $0x10] sm:$0xff]
    %v1176 = vld [vmem:[#allocation11 + $0x18] sm:$0xff]
    %v1177 = vld [vmem:[#allocation11 + $0x20] sm:$0xff]
    %v1178 = vld [vmem:[#allocation11 + $0x28] sm:$0xff]
    %v1179 = vld [vmem:[#allocation11 + $0x30] sm:$0xff]
    %v1180 = vld [vmem:[#allocation11 + $0x38] sm:$0xff]
    %v1181 = vld [vmem:[#allocation11 + $0x40] sm:$0xff]
    %v1182 = vld [vmem:[#allocation11 + $0x48] sm:$0xff]
    %v1183 = vld [vmem:[#allocation11 + $0x50] sm:$0xff]
    %v1184 = vld [vmem:[#allocation11 + $0x58] sm:$0xff]
    %v1185 = vld [vmem:[#allocation11 + $0x60] sm:$0xff]
    %v1186 = vld [vmem:[#allocation11 + $0x68] sm:$0xff]
    %v1187 = vld [vmem:[#allocation11 + $0x70] sm:$0xff]
    %v1188 = vld [vmem:[#allocation11 + $0x78] sm:$0xff]
    %v1198 = vsel %vm693, %v1123, %v1116
    %v1199 = vsel %vm695, %v1130, %v1198
    %v1200 = vsel %vm697, %v1137, %v1199
    %v1201 = vsel %vm699, %v1144, %v1200
    %v1202 = vsel %vm701, %v1151, %v1201
    %v1203 = vsel %vm703, %v1158, %v1202
    %v1204 = vsel %vm705, %v1165, %v1203
    %1207 = vmatprep.subr.mxu0 0.0
    %1208 = vmatpush1.msra.mxu0 %v1188
    %1209 = vmatprep.subr.mxu0 0.0
    %1210 = vmatpush1.msra.mxu0 %v1187
    %1211 = vmatprep.subr.mxu0 0.0
    %1212 = vmatpush1.msra.mxu0 %v1186
    %1213 = vmatprep.subr.mxu0 0.0
    %1214 = vmatpush1.msra.mxu0 %v1185
    %1215 = vmatprep.subr.mxu0 0.0
    %1216 = vmatpush1.msra.mxu0 %v1184
    %1217 = vmatprep.subr.mxu0 0.0
    %1218 = vmatpush1.msra.mxu0 %v1183
    %1219 = vmatprep.subr.mxu0 0.0
    %1220 = vmatpush1.msra.mxu0 %v1182
    %1221 = vmatprep.subr.mxu0 0.0
    %1222 = vmatpush1.msra.mxu0 %v1181
    %1223 = vmatprep.subr.mxu0 0.0
    %1224 = vmatpush1.msra.mxu0 %v1180
    %1225 = vmatprep.subr.mxu0 0.0
    %1226 = vmatpush1.msra.mxu0 %v1179
    %1227 = vmatprep.subr.mxu0 0.0
    %1228 = vmatpush1.msra.mxu0 %v1178
    %1229 = vmatprep.subr.mxu0 0.0
    %1230 = vmatpush1.msra.mxu0 %v1177
    %1231 = vmatprep.subr.mxu0 0.0
    %1232 = vmatpush1.msra.mxu0 %v1176
    %1233 = vmatprep.subr.mxu0 0.0
    %1234 = vmatpush1.msra.mxu0 %v1175
    %1235 = vmatprep.subr.mxu0 0.0
    %1236 = vmatpush1.msra.mxu0 %v1174
    %1237 = vmatprep.subr.mxu0 0.0
    %1238 = vmatpush1.msra.mxu0 %v1173
    %1239 = vmatprep.subr.mxu0 0.0
    %1240 = vmatpush2.msra.mxu0 0.0
    %1241 = vmatprep.subr.mxu0 0.0
    %1242 = vmatpush2.msra.mxu0 0.0
    %1243 = vmatprep.subr.mxu0 0.0
    %1244 = vmatpush2.msra.mxu0 0.0
    %1245 = vmatprep.subr.mxu0 0.0
    %1246 = vmatpush2.msra.mxu0 0.0
    %1247 = vmatprep.subr.mxu0 0.0
    %1248 = vmatpush2.msra.mxu0 0.0
    %1249 = vmatprep.subr.mxu0 0.0
    %1250 = vmatpush2.msra.mxu0 0.0
    %1251 = vmatprep.subr.mxu0 0.0
    %1252 = vmatpush2.msra.mxu0 0.0
    %1253 = vmatprep.subr.mxu0 0.0
    %1254 = vmatpush2.msra.mxu0 0.0
    %1255 = vmatprep.subr.mxu0 0.0
    %1256 = vmatpush2.msra.mxu0 0.0
    %1257 = vmatprep.subr.mxu0 0.0
    %1258 = vmatpush2.msra.mxu0 0.0
    %1259 = vmatprep.subr.mxu0 0.0
    %1260 = vmatpush2.msra.mxu0 0.0
    %1261 = vmatprep.subr.mxu0 0.0
    %1262 = vmatpush2.msra.mxu0 0.0
    %1263 = vmatprep.subr.mxu0 0.0
    %1264 = vmatpush2.msra.mxu0 0.0
    %1265 = vmatprep.subr.mxu0 0.0
    %1266 = vmatpush2.msra.mxu0 0.0
    %1267 = vmatprep.subr.mxu0 0.0
    %1268 = vmatpush2.msra.mxu0 0.0
    %1269 = vmatprep.subr.mxu0 0.0
    %1270 = vmatpush2.msra.mxu0 0.0
    %1271 = vmatprep.mubr.f32.mxu0 0.0
    %1272 = vmatmul.mubr.f32.gmra.mxu0 %v1204
    %v1273 = vpop.f32.mrf.mxu0
    %v1274 = vadd.f32 0.0, %v1273
    %v1275 = vpop.f32.mrf.mxu0
    %1276 = vmatprep.mubr.f32.mxu0 0.0
    %1277 = vmatmul.mubr.f32.gmra.mxu0 %v1172
    %v1278 = vpop.f32.mrf.mxu0
    %v1279 = vadd.f32 0.0, %v1278
    %v1280 = vpop.f32.mrf.mxu0
    %1281 = vdwg.mxu0
    %1284 = vrot.lane.b32.xlu0 %v1274, 64
    %v1285 = vpop.permute.xlu0 %1284
    %1286 = vrot.lane.b32.xlu0 %v1279, 64
    %v1287 = vpop.permute.xlu0 %1286
    %v1290 = vmax.f32 %v1274, %v1285
    %v1291 = vmax.f32 %v1279, %v1287
    %1292 = vst.msk [vmem:[#allocation4] sm:$0x1] %vm132, 0.0
    %vm1293 = vcmask 519168
    %1294 = vst.msk [vmem:[#allocation4 + $0x1] sm:$0xf] %vm1293, %v1290
    %1295 = vst.msk [vmem:[#allocation4 + $0x5] sm:$0x1] %vm132, 0.0
    %1296 = vst.msk [vmem:[#allocation4 + $0x6] sm:$0x1] %vm132, 0.0
    %vm1297 = vcmask 523269
    %1298 = vst.msk [vmem:[#allocation4 + $0x2] sm:$0xe0] %vm1297, %v1290
    %1299 = vst.msk [vmem:[#allocation4 + $0xa] sm:$0x1] %vm132, %v1291
    %1300 = vst.msk [vmem:[#allocation4 + $0xb] sm:$0x1] %vm132, 0.0
    %v1301 = vld [vmem:[#allocation4] sm:$0xff]
    %v1302 = vld [vmem:[#allocation4 + $0x8] sm:$0xf]
    %v1303 = vld [vmem:[#allocation13] sm:$0xff]
    %v1304 = vld [vmem:[#allocation13 + $0x8] sm:$0xff]
    %v1305 = vld [vmem:[#allocation13 + $0x10] sm:$0xff]
    %v1306 = vld [vmem:[#allocation13 + $0x18] sm:$0xff]
    %v1307 = vld [vmem:[#allocation13 + $0x20] sm:$0xff]
    %v1308 = vld [vmem:[#allocation13 + $0x28] sm:$0xff]
    %v1309 = vld [vmem:[#allocation13 + $0x30] sm:$0xff]
    %v1310 = vld [vmem:[#allocation13 + $0x38] sm:$0xff]
    %v1312 = vsel %vm136, %v1301, 0
    %v1315 = vsel %vm136, %v1302, 0
    %1317 = vmatprep.subr.mxu0 0.0
    %1318 = vmatpush1.msra.mxu0 0.0
    %1319 = vmatprep.subr.mxu0 0.0
    %1320 = vmatpush1.msra.mxu0 0.0
    %1321 = vmatprep.subr.mxu0 0.0
    %1322 = vmatpush1.msra.mxu0 0.0
    %1323 = vmatprep.subr.mxu0 0.0
    %1324 = vmatpush1.msra.mxu0 0.0
    %1325 = vmatprep.subr.mxu0 0.0
    %1326 = vmatpush1.msra.mxu0 0.0
    %1327 = vmatprep.subr.mxu0 0.0
    %1328 = vmatpush1.msra.mxu0 0.0
    %1329 = vmatprep.subr.mxu0 0.0
    %1330 = vmatpush1.msra.mxu0 0.0
    %1331 = vmatprep.subr.mxu0 0.0
    %1332 = vmatpush1.msra.mxu0 0.0
    %1333 = vmatprep.subr.mxu0 0.0
    %1334 = vmatpush1.msra.mxu0 %v1310
    %1335 = vmatprep.subr.mxu0 0.0
    %1336 = vmatpush1.msra.mxu0 %v1309
    %1337 = vmatprep.subr.mxu0 0.0
    %1338 = vmatpush1.msra.mxu0 %v1308
    %1339 = vmatprep.subr.mxu0 0.0
    %1340 = vmatpush1.msra.mxu0 %v1307
    %1341 = vmatprep.subr.mxu0 0.0
    %1342 = vmatpush1.msra.mxu0 %v1306
    %1343 = vmatprep.subr.mxu0 0.0
    %1344 = vmatpush1.msra.mxu0 %v1305
    %1345 = vmatprep.subr.mxu0 0.0
    %1346 = vmatpush1.msra.mxu0 %v1304
    %1347 = vmatprep.subr.mxu0 0.0
    %1348 = vmatpush1.msra.mxu0 %v1303
    %1349 = vmatprep.subr.mxu0 0.0
    %1350 = vmatpush2.msra.mxu0 0.0
    %1351 = vmatprep.subr.mxu0 0.0
    %1352 = vmatpush2.msra.mxu0 0.0
    %1353 = vmatprep.subr.mxu0 0.0
    %1354 = vmatpush2.msra.mxu0 0.0
    %1355 = vmatprep.subr.mxu0 0.0
    %1356 = vmatpush2.msra.mxu0 0.0
    %1357 = vmatprep.subr.mxu0 0.0
    %1358 = vmatpush2.msra.mxu0 0.0
    %1359 = vmatprep.subr.mxu0 0.0
    %1360 = vmatpush2.msra.mxu0 0.0
    %1361 = vmatprep.subr.mxu0 0.0
    %1362 = vmatpush2.msra.mxu0 0.0
    %1363 = vmatprep.subr.mxu0 0.0
    %1364 = vmatpush2.msra.mxu0 0.0
    %1365 = vmatprep.subr.mxu0 0.0
    %1366 = vmatpush2.msra.mxu0 0.0
    %1367 = vmatprep.subr.mxu0 0.0
    %1368 = vmatpush2.msra.mxu0 0.0
    %1369 = vmatprep.subr.mxu0 0.0
    %1370 = vmatpush2.msra.mxu0 0.0
    %1371 = vmatprep.subr.mxu0 0.0
    %1372 = vmatpush2.msra.mxu0 0.0
    %1373 = vmatprep.subr.mxu0 0.0
    %1374 = vmatpush2.msra.mxu0 0.0
    %1375 = vmatprep.subr.mxu0 0.0
    %1376 = vmatpush2.msra.mxu0 0.0
    %1377 = vmatprep.subr.mxu0 0.0
    %1378 = vmatpush2.msra.mxu0 0.0
    %1379 = vmatprep.subr.mxu0 0.0
    %1380 = vmatpush2.msra.mxu0 0.0
    %1381 = vmatprep.mubr.f32.mxu0 0.0
    %1382 = vmatmul.mubr.f32.gmra.mxu0 %v1312
    %v1383 = vpop.f32.mrf.mxu0
    %v1384 = vadd.f32 0.0, %v1383
    %v1385 = vpop.f32.mrf.mxu0
    %1386 = vmatprep.mubr.f32.mxu0 0.0
    %1387 = vmatmul.mubr.f32.gmra.mxu0 %v1315
    %v1388 = vpop.f32.mrf.mxu0
    %v1389 = vadd.f32 0.0, %v1388
    %v1390 = vpop.f32.mrf.mxu0
    %1391 = vdwg.mxu0
    %v1394 = vrot.slane %v1384, 1
    %v1395 = vrot.slane %v1389, 1
    %v1396 = vsel %vm381, %v1394, %v1395
    %1397 = vrot.lane.b32.xlu0 %v1396, 96
    %v1398 = vpop.permute.xlu0 %1397
    %1399 = vrot.lane.b32.xlu0 %v1395, 96
    %v1400 = vpop.permute.xlu0 %1399
    %v1403 = vadd.f32 %v1384, %v1398
    %v1404 = vadd.f32 %v1389, %v1400
    %v1405 = vrot.slane %v1384, 2
    %v1406 = vrot.slane %v1389, 2
    %v1407 = vsel %vm406, %v1405, %v1406
    %1408 = vrot.lane.b32.xlu0 %v1407, 64
    %v1409 = vpop.permute.xlu0 %1408
    %1410 = vrot.lane.b32.xlu0 %v1406, 64
    %v1411 = vpop.permute.xlu0 %1410
    %v1414 = vadd.f32 %v1403, %v1409
    %v1415 = vadd.f32 %v1404, %v1411
    %v1416 = vld [vmem:[#allocation14] sm:$0x1]
    %v1418 = vlaneseq
    %v1419 = vshrl.u32 %v1418, 7
    %v1420 = vsub.s32 0, %v1419
    %v1421 = vrot.slane %v1416, %v1420
    %v1423 = vadd.f32 %v1414, %v1421
    %v1424 = vadd.f32 %v1415, %v1421
    %v1427 = vcombine.high %v1423, %v1423
    %v1429 = vunpack.c.l.s4 1983009808
    %v1430 = vunpack.c.0.s8 %v1429
    %v1431 = vlaneseq
    %v1432 = vshrl.u32 %v1431, 7
    %v1433 = vsub.s32 %v1430, %v1432
    %v1434 = vrot.slane %v1423, %v1433
    %v1436 = vunpack.c.l.s4 1983009808
    %v1437 = vunpack.c.0.s8 %v1436
    %v1438 = vlaneseq
    %v1439 = vshrl.u32 %v1438, 7
    %v1440 = vsub.s32 %v1437, %v1439
    %v1441 = vrot.slane %v1427, %v1440
    %v1442 = vcombine.high %v1434, %v1434
    %v1443 = vcombine.high %v1441, %v1441
    %v1445 = vunpack.c.l.s4 1983009808
    %v1446 = vunpack.c.0.s8 %v1445
    %v1447 = vlaneseq
    %v1448 = vshrl.u32 %v1447, 7
    %v1449 = vsub.s32 %v1446, %v1448
    %v1450 = vrot.slane %v1424, %v1449
    %vm1456 = vcmask 254976
    %v1457 = vsel %vm1456, %v1434, -inf
    %v1458 = vrot.slane %v1457, 4
    %v1459 = vmax.f32 %v1457, %v1458
    %v1460 = vrot.slane %v1459, 2
    %v1461 = vmax.f32 %v1459, %v1460
    %v1462 = vrot.slane %v1461, 1
    %v1463 = vmax.f32 %v1461, %v1462
    %v1464 = vsel %vm1456, %v1442, -inf
    %v1465 = vrot.slane %v1464, 4
    %v1466 = vmax.f32 %v1464, %v1465
    %v1467 = vrot.slane %v1466, 2
    %v1468 = vmax.f32 %v1466, %v1467
    %v1469 = vrot.slane %v1468, 1
    %v1470 = vmax.f32 %v1468, %v1469
    %v1471 = vsel %vm1456, %v1441, -inf
    %v1472 = vrot.slane %v1471, 4
    %v1473 = vmax.f32 %v1471, %v1472
    %v1474 = vrot.slane %v1473, 2
    %v1475 = vmax.f32 %v1473, %v1474
    %v1476 = vrot.slane %v1475, 1
    %v1477 = vmax.f32 %v1475, %v1476
    %v1478 = vsel %vm1456, %v1443, -inf
    %v1479 = vrot.slane %v1478, 4
    %v1480 = vmax.f32 %v1478, %v1479
    %v1481 = vrot.slane %v1480, 2
    %v1482 = vmax.f32 %v1480, %v1481
    %v1483 = vrot.slane %v1482, 1
    %v1484 = vmax.f32 %v1482, %v1483
    %v1485 = vsel %vm1456, %v1450, -inf
    %v1486 = vrot.slane %v1485, 4
    %v1487 = vmax.f32 %v1485, %v1486
    %v1488 = vrot.slane %v1487, 2
    %v1489 = vmax.f32 %v1487, %v1488
    %v1490 = vrot.slane %v1489, 1
    %v1491 = vmax.f32 %v1489, %v1490
    %v1492 = vld [vmem:[%s9] sm:$0xff]
    %v1493 = vld [vmem:[%s9 + $0x8] sm:$0xff]
    %v1494 = vld [vmem:[%s9 + $0x10] sm:$0xff]
    %v1495 = vld [vmem:[%s9 + $0x18] sm:$0xff]
    %v1501 = vsel %vm693, %v1470, %v1463
    %v1502 = vsel %vm695, %v1477, %v1501
    %v1503 = vsel %vm697, %v1484, %v1502
    %v1504 = vsel %vm699, %v1491, %v1503
    %vm1505 = vcmask 261120
    %v1506 = vsel %vm1505, %v1504, 0
    %1508 = vmatprep.subr.mxu0 0.0
    %1509 = vmatpush1.msra.mxu0 0.0
    %1510 = vmatprep.subr.mxu0 0.0
    %1511 = vmatpush1.msra.mxu0 0.0
    %1512 = vmatprep.subr.mxu0 0.0
    %1513 = vmatpush1.msra.mxu0 0.0
    %1514 = vmatprep.subr.mxu0 0.0
    %1515 = vmatpush1.msra.mxu0 0.0
    %1516 = vmatprep.subr.mxu0 0.0
    %1517 = vmatpush1.msra.mxu0 0.0
    %1518 = vmatprep.subr.mxu0 0.0
    %1519 = vmatpush1.msra.mxu0 0.0
    %1520 = vmatprep.subr.mxu0 0.0
    %1521 = vmatpush1.msra.mxu0 0.0
    %1522 = vmatprep.subr.mxu0 0.0
    %1523 = vmatpush1.msra.mxu0 0.0
    %1524 = vmatprep.subr.mxu0 0.0
    %1525 = vmatpush1.msra.mxu0 0.0
    %1526 = vmatprep.subr.mxu0 0.0
    %1527 = vmatpush1.msra.mxu0 0.0
    %1528 = vmatprep.subr.mxu0 0.0
    %1529 = vmatpush1.msra.mxu0 0.0
    %1530 = vmatprep.subr.mxu0 0.0
    %1531 = vmatpush1.msra.mxu0 0.0
    %1532 = vmatprep.subr.mxu0 0.0
    %1533 = vmatpush1.msra.mxu0 %v1495
    %1534 = vmatprep.subr.mxu0 0.0
    %1535 = vmatpush1.msra.mxu0 %v1494
    %1536 = vmatprep.subr.mxu0 0.0
    %1537 = vmatpush1.msra.mxu0 %v1493
    %1538 = vmatprep.subr.mxu0 0.0
    %1539 = vmatpush1.msra.mxu0 %v1492
    %1540 = vmatprep.subr.mxu0 0.0
    %1541 = vmatpush2.msra.mxu0 0.0
    %1542 = vmatprep.subr.mxu0 0.0
    %1543 = vmatpush2.msra.mxu0 0.0
    %1544 = vmatprep.subr.mxu0 0.0
    %1545 = vmatpush2.msra.mxu0 0.0
    %1546 = vmatprep.subr.mxu0 0.0
    %1547 = vmatpush2.msra.mxu0 0.0
    %1548 = vmatprep.subr.mxu0 0.0
    %1549 = vmatpush2.msra.mxu0 0.0
    %1550 = vmatprep.subr.mxu0 0.0
    %1551 = vmatpush2.msra.mxu0 0.0
    %1552 = vmatprep.subr.mxu0 0.0
    %1553 = vmatpush2.msra.mxu0 0.0
    %1554 = vmatprep.subr.mxu0 0.0
    %1555 = vmatpush2.msra.mxu0 0.0
    %1556 = vmatprep.subr.mxu0 0.0
    %1557 = vmatpush2.msra.mxu0 0.0
    %1558 = vmatprep.subr.mxu0 0.0
    %1559 = vmatpush2.msra.mxu0 0.0
    %1560 = vmatprep.subr.mxu0 0.0
    %1561 = vmatpush2.msra.mxu0 0.0
    %1562 = vmatprep.subr.mxu0 0.0
    %1563 = vmatpush2.msra.mxu0 0.0
    %1564 = vmatprep.subr.mxu0 0.0
    %1565 = vmatpush2.msra.mxu0 0.0
    %1566 = vmatprep.subr.mxu0 0.0
    %1567 = vmatpush2.msra.mxu0 0.0
    %1568 = vmatprep.subr.mxu0 0.0
    %1569 = vmatpush2.msra.mxu0 0.0
    %1570 = vmatprep.subr.mxu0 0.0
    %1571 = vmatpush2.msra.mxu0 0.0
    %1572 = vmatprep.mubr.f32.mxu0 0.0
    %1573 = vmatmul.mubr.f32.gmra.mxu0 %v1506
    %v1574 = vpop.f32.mrf.mxu0
    %v1575 = vadd.f32 0.0, %v1574
    %v1576 = vpop.f32.mrf.mxu0
    %1577 = vdwg.mxu0
    %1579 = vrot.lane.b32.xlu0 %v1575, 112
    %v1580 = vpop.permute.xlu0 %1579
    %v1582 = vmax.f32 %v1575, %v1580
    %v1583 = vld [vmem:[%s10] sm:$0x3]
    %vm1584 = vcmask 39936
    %v1586 = vsel %vm1584, %v1583, 0
    %vm1588 = vcmask 1044480
    %v1590 = vsel %vm1588, %v1582, 0
    %1592 = vmatprep.subr.mxu0 0.0
    %1593 = vmatpush1.msra.mxu0 0.0
    %1594 = vmatprep.subr.mxu0 0.0
    %1595 = vmatpush1.msra.mxu0 0.0
    %1596 = vmatprep.subr.mxu0 0.0
    %1597 = vmatpush1.msra.mxu0 0.0
    %1598 = vmatprep.subr.mxu0 0.0
    %1599 = vmatpush1.msra.mxu0 0.0
    %1600 = vmatprep.subr.mxu0 0.0
    %1601 = vmatpush1.msra.mxu0 0.0
    %1602 = vmatprep.subr.mxu0 0.0
    %1603 = vmatpush1.msra.mxu0 0.0
    %1604 = vmatprep.subr.mxu0 0.0
    %1605 = vmatpush1.msra.mxu0 0.0
    %1606 = vmatprep.subr.mxu0 0.0
    %1607 = vmatpush1.msra.mxu0 0.0
    %1608 = vmatprep.subr.mxu0 0.0
    %1609 = vmatpush1.msra.mxu0 0.0
    %1610 = vmatprep.subr.mxu0 0.0
    %1611 = vmatpush1.msra.mxu0 0.0
    %1612 = vmatprep.subr.mxu0 0.0
    %1613 = vmatpush1.msra.mxu0 0.0
    %1614 = vmatprep.subr.mxu0 0.0
    %1615 = vmatpush1.msra.mxu0 0.0
    %1616 = vmatprep.subr.mxu0 0.0
    %1617 = vmatpush1.msra.mxu0 0.0
    %1618 = vmatprep.subr.mxu0 0.0
    %1619 = vmatpush1.msra.mxu0 0.0
    %1620 = vmatprep.subr.mxu0 0.0
    %1621 = vmatpush1.msra.mxu0 0.0
    %1622 = vmatprep.subr.mxu0 0.0
    %1623 = vmatpush1.msra.mxu0 %v1590
    %1624 = vmatprep.subr.mxu0 0.0
    %1625 = vmatpush2.msra.mxu0 0.0
    %1626 = vmatprep.subr.mxu0 0.0
    %1627 = vmatpush2.msra.mxu0 0.0
    %1628 = vmatprep.subr.mxu0 0.0
    %1629 = vmatpush2.msra.mxu0 0.0
    %1630 = vmatprep.subr.mxu0 0.0
    %1631 = vmatpush2.msra.mxu0 0.0
    %1632 = vmatprep.subr.mxu0 0.0
    %1633 = vmatpush2.msra.mxu0 0.0
    %1634 = vmatprep.subr.mxu0 0.0
    %1635 = vmatpush2.msra.mxu0 0.0
    %1636 = vmatprep.subr.mxu0 0.0
    %1637 = vmatpush2.msra.mxu0 0.0
    %1638 = vmatprep.subr.mxu0 0.0
    %1639 = vmatpush2.msra.mxu0 0.0
    %1640 = vmatprep.subr.mxu0 0.0
    %1641 = vmatpush2.msra.mxu0 0.0
    %1642 = vmatprep.subr.mxu0 0.0
    %1643 = vmatpush2.msra.mxu0 0.0
    %1644 = vmatprep.subr.mxu0 0.0
    %1645 = vmatpush2.msra.mxu0 0.0
    %1646 = vmatprep.subr.mxu0 0.0
    %1647 = vmatpush2.msra.mxu0 0.0
    %1648 = vmatprep.subr.mxu0 0.0
    %1649 = vmatpush2.msra.mxu0 0.0
    %1650 = vmatprep.subr.mxu0 0.0
    %1651 = vmatpush2.msra.mxu0 0.0
    %1652 = vmatprep.subr.mxu0 0.0
    %1653 = vmatpush2.msra.mxu0 0.0
    %1654 = vmatprep.subr.mxu0 0.0
    %1655 = vmatpush2.msra.mxu0 0.0
    %1656 = vmatprep.mubr.f32.mxu0 0.0
    %1657 = vmatmul.mubr.f32.gmra.mxu0 %v1586
    %v1658 = vpop.f32.mrf.mxu0
    %v1659 = vadd.f32 0.0, %v1658
    %v1660 = vpop.f32.mrf.mxu0
    %1661 = vdwg.mxu0
    %v1662 = vld [vmem:[%s11] sm:$0xff]
    %v1663 = vld [vmem:[%s11 + $0x8] sm:$0xff]
    %v1664 = vld [vmem:[#allocation16] sm:$0x1]
    %v1666 = vlaneseq
    %v1667 = vshrl.u32 %v1666, 7
    %v1668 = vsub.s32 0, %v1667
    %v1669 = vrot.slane %v1664, %v1668
    %vm1671 = vcmask 130048
    %v1673 = vsel %vm1671, %v1659, 0
    %1675 = vmatprep.subr.mxu0 0.0
    %1676 = vmatpush1.msra.mxu0 0.0
    %1677 = vmatprep.subr.mxu0 0.0
    %1678 = vmatpush1.msra.mxu0 0.0
    %1679 = vmatprep.subr.mxu0 0.0
    %1680 = vmatpush1.msra.mxu0 0.0
    %1681 = vmatprep.subr.mxu0 0.0
    %1682 = vmatpush1.msra.mxu0 0.0
    %1683 = vmatprep.subr.mxu0 0.0
    %1684 = vmatpush1.msra.mxu0 0.0
    %1685 = vmatprep.subr.mxu0 0.0
    %1686 = vmatpush1.msra.mxu0 0.0
    %1687 = vmatprep.subr.mxu0 0.0
    %1688 = vmatpush1.msra.mxu0 0.0
    %1689 = vmatprep.subr.mxu0 0.0
    %1690 = vmatpush1.msra.mxu0 0.0
    %1691 = vmatprep.subr.mxu0 0.0
    %1692 = vmatpush1.msra.mxu0 0.0
    %1693 = vmatprep.subr.mxu0 0.0
    %1694 = vmatpush1.msra.mxu0 0.0
    %1695 = vmatprep.subr.mxu0 0.0
    %1696 = vmatpush1.msra.mxu0 0.0
    %1697 = vmatprep.subr.mxu0 0.0
    %1698 = vmatpush1.msra.mxu0 0.0
    %1699 = vmatprep.subr.mxu0 0.0
    %1700 = vmatpush1.msra.mxu0 0.0
    %1701 = vmatprep.subr.mxu0 0.0
    %1702 = vmatpush1.msra.mxu0 0.0
    %1703 = vmatprep.subr.mxu0 0.0
    %1704 = vmatpush1.msra.mxu0 %v1663
    %1705 = vmatprep.subr.mxu0 0.0
    %1706 = vmatpush1.msra.mxu0 %v1662
    %1707 = vmatprep.subr.mxu0 0.0
    %1708 = vmatpush2.msra.mxu0 0.0
    %1709 = vmatprep.subr.mxu0 0.0
    %1710 = vmatpush2.msra.mxu0 0.0
    %1711 = vmatprep.subr.mxu0 0.0
    %1712 = vmatpush2.msra.mxu0 0.0
    %1713 = vmatprep.subr.mxu0 0.0
    %1714 = vmatpush2.msra.mxu0 0.0
    %1715 = vmatprep.subr.mxu0 0.0
    %1716 = vmatpush2.msra.mxu0 0.0
    %1717 = vmatprep.subr.mxu0 0.0
    %1718 = vmatpush2.msra.mxu0 0.0
    %1719 = vmatprep.subr.mxu0 0.0
    %1720 = vmatpush2.msra.mxu0 0.0
    %1721 = vmatprep.subr.mxu0 0.0
    %1722 = vmatpush2.msra.mxu0 0.0
    %1723 = vmatprep.subr.mxu0 0.0
    %1724 = vmatpush2.msra.mxu0 0.0
    %1725 = vmatprep.subr.mxu0 0.0
    %1726 = vmatpush2.msra.mxu0 0.0
    %1727 = vmatprep.subr.mxu0 0.0
    %1728 = vmatpush2.msra.mxu0 0.0
    %1729 = vmatprep.subr.mxu0 0.0
    %1730 = vmatpush2.msra.mxu0 0.0
    %1731 = vmatprep.subr.mxu0 0.0
    %1732 = vmatpush2.msra.mxu0 0.0
    %1733 = vmatprep.subr.mxu0 0.0
    %1734 = vmatpush2.msra.mxu0 0.0
    %1735 = vmatprep.subr.mxu0 0.0
    %1736 = vmatpush2.msra.mxu0 0.0
    %1737 = vmatprep.subr.mxu0 0.0
    %1738 = vmatpush2.msra.mxu0 0.0
    %1739 = vmatprep.mubr.f32.mxu0 0.0
    %1740 = vmatmul.mubr.f32.gmra.mxu0 %v1673
    %v1741 = vpop.f32.mrf.mxu0
    %v1742 = vadd.f32 %v1669, %v1741
    %v1743 = vpop.f32.mrf.mxu0
    %1744 = vdwg.mxu0
    %vm1745 = vcmask 74752
    %1746 = vst.msk [vmem:[#allocation17] sm:$0x3] %vm1745, %v1742
    // Predicated region
    $region82: #{model_forward.1} parent=1 // pred_check
      _
    $region83: #{model_forward.1} parent=1 // pred_check_branch
      %1748 = sbr.rel (0) target = $region85
    $region84: #{model_forward.1} parent=1 // pred_region
      %s1750 = ssub.s32 32, 32
      %1751 = vsyncadd [#allocation7], %s1750
      %s1753 = sshll.u32 [#allocation17], 4
      %s1754 = int_to_ptr.vmem [resolvable:$true] %s1753
      %1756 = dma.vmem_to_hbm [thread:$0]  %s1754, 32, %s13, [#allocation7]
    $region85: #{model_forward.1} parent=1 // pred_fallthru
      _
    // Predicated region
    $region86: #{model_forward.1} parent=1 // pred_check
      _
    $region87: #{model_forward.1} parent=1 // pred_check_branch
      %1758 = sbr.rel (0) target = $region89
    $region88: #{model_forward.1} parent=1 // pred_region
      %1759 = dma.done [#allocation7], 32
    $region89: #{model_forward.1} parent=1 // pred_fallthru
      _
    %1760 = vsyncpa [#allocation6], 1
    %1761 = vsyncpa [#allocation9], 1
    %1762 = vsyncpa [#allocation12], 1
    %1763 = vsyncpa [#allocation15], 1
    %1764 = vsyncpa [#allocation7], 1

</llo_original>
